<compile_context>
chip_gen: v7x
topology: tpu7x:2x2x1
jax: 0.10.0
libtpu: 0.0.40
codegen_flags: <defaults>
</compile_context>

<pallas_src>
import functools

import jax
import jax.numpy as jnp
from jax.experimental import pallas as pl
from jax.experimental.pallas import tpu as pltpu


def _round_up(a, b):
    return ((a + b - 1) // b) * b


def _vmem_limit_bytes():
    """Generation-aware VMEM limit (v7x: 64 MiB physical; v5e/v6e: 128 MiB)."""
    try:
        cap = int(pltpu.get_tpu_info().vmem_capacity_bytes)
    except Exception:
        cap = 64 << 20                      # conservative: v7x physical per-TC
    return max(32 << 20, min((cap * 3) // 4, 96 << 20))


def _pick_tile_b(B, c_used, Q, live_rows, n_blocks, vmem_limit):
    """Batch tile on the lane axis: multiple of 128, sized against the real
    VMEM live set, preferring >=4 (pipeline) / >=2 (v7x megacore) grid steps
    whenever the batch is large enough that this adds no padding."""
    b128 = _round_up(B, 128)
    per_lane = 4 * (2 * c_used * Q          # double-buffered x block
                    + live_rows * Q         # live (P, tile_b) f32 temporaries
                    + 2 * n_blocks)         # double-buffered output block
    budget = vmem_limit // 2                # headroom for compiler scratch
    tile_b = max(128, min(budget // max(per_lane, 1), b128) // 128 * 128)
    for target in (4, 2):
        t = (b128 // target) // 128 * 128
        if t >= 128:
            tile_b = min(tile_b, t)
            break
    padded_B = _round_up(B, tile_b)
    return tile_b, padded_B


def _fused_kernel(shp_ref, ss_ref, x_ref, posw_ref, out_ref, *, Q, window_groups):
    """All FeatureBlocks, one batch tile (batch on the lane axis).

    shp_ref  : (total_L,)          f32 SMEM  -- all shapelets, flattened
    ss_ref   : (2*n_blocks,)       f32 SMEM  -- per block: sum(s), sum(s^2)
    x_ref    : (C_used, Q, tile_b) f32 VMEM  -- referenced channels, batch on lanes
    posw_ref : (max_P, n_blocks)   f32 VMEM  -- (posSlope*elu(-posMap)+2)/L, padded
    out_ref  : (n_blocks, tile_b)  f32 VMEM  -- relu(min_p weighted distance)

    window_groups: static tuple of (c_loc, L, dilation, entries) where entries
    is a tuple of (block_idx, scaleType, eps, shapelet_offset).  Blocks sharing
    (channel, L, dilation) share their window statistics.
    """
    for c_loc, L, dil, entries in window_groups:
        P = Q - (L - 1) * dil
        inv_L = 1.0 / float(L)
        need_mean = any(st != 0 for (_, st, _, _) in entries)
        need_std = any(st == 2 for (_, st, _, _) in entries)

        # Shapelet scalars (SMEM, statically indexed).
        svals = {g: [shp_ref[off + l] for l in range(L)]
                 for (g, _, _, off) in entries}

        # Single pass over the L dilated windows.  sum_w / sum_w2 are shared
        # by every shapelet on this (channel, L, dilation); only sum(s_l*w_l)
        # is per-shapelet.
        sum_w = None
        sum_w2 = None
        sum_sw = {}
        for l in range(L):
            w = x_ref[c_loc, l * dil: l * dil + P, :]        # (P, tile_b)
            if l == 0:
                sum_w2 = w * w
                if need_mean:
                    sum_w = w
                for (g, _, _, _) in entries:
                    sum_sw[g] = svals[g][0] * w
            else:
                sum_w2 = sum_w2 + w * w
                if need_mean:
                    sum_w = sum_w + w
                for (g, _, _, _) in entries:
                    sum_sw[g] = sum_sw[g] + svals[g][l] * w

        mean = css = std = None
        if need_mean:
            mean = sum_w * inv_L
            css = sum_w2 - float(L) * mean * mean            # sum_l (w_l - mean)^2
        if need_std:
            var = css * (1.0 / float(L - 1))                 # Bessel (torch.std)
            std = jnp.sqrt(jnp.maximum(var, 0.0))

        inv_cache = {}
        for (g, st, eps, _off) in entries:
            ss1 = ss_ref[2 * g]
            ss2 = ss_ref[2 * g + 1]
            if st == 0:
                # sum_l (s_l - w_l)^2
                dsum = ss2 - 2.0 * sum_sw[g] + sum_w2
            elif st == 1:
                # mean-centered windows: sum_l (s_l - (w_l - mean))^2
                dsum = ss2 - 2.0 * sum_sw[g] + 2.0 * mean * ss1 + css
            else:
                # z-normalised windows (torch.std, eps added to std); exact
                # divide kept for torch parity, hoisted out of the L loop.
                if eps not in inv_cache:
                    inv_cache[eps] = 1.0 / (std + eps)
                inv = inv_cache[eps]
                dsum = (ss2 - 2.0 * inv * (sum_sw[g] - mean * ss1)
                        + (inv * inv) * css)

            # posw already carries the 1/L of the mean over shapelet length.
            ftrs = dsum * posw_ref[0:P, g:g + 1]             # (P, tile_b)
            out_ref[g, :] = jnp.maximum(jnp.min(ftrs, axis=0), 0.0)


def shapelet_layer_forward(x, blocks, ep=0):
    """blocks: list of dicts with keys shapelet, posMap, posSlope, m, dilation,
    scaleType, eps.  `ep` only controls gradient detaching in PyTorch (forward
    values identical), so it is unused here."""
    B, C, Q = x.shape
    n_blocks = len(blocks)

    # ---- static per-block config ---------------------------------------
    cfgs = []
    for g, p in enumerate(blocks):
        L = int(p["shapelet"].shape[-1])
        st = int(p["scaleType"])
        if st == 2:
            assert L >= 2, "scaleType==2 requires L >= 2 (torch.std, ddof=1)"
        dil = int(p["dilation"])
        cfgs.append(dict(g=g, m=int(p["m"]), L=L, dil=dil, st=st,
                         eps=float(p["eps"]), P=Q - (L - 1) * dil))
    max_P = max(c["P"] for c in cfgs)

    # Gather only the channels actually referenced.
    unique_ms = sorted({c["m"] for c in cfgs})
    chan_map = {m: i for i, m in enumerate(unique_ms)}
    C_used = len(unique_ms)

    # Shapelets flattened (SMEM) + per-block offsets; sum(s), sum(s^2) hoisted.
    shp_parts, ss_vals, offs = [], [], []
    off = 0
    for c, p in zip(cfgs, blocks):
        s = p["shapelet"].reshape(c["L"]).astype(jnp.float32)
        shp_parts.append(s)
        ss_vals.extend([jnp.sum(s), jnp.sum(s * s)])
        offs.append(off)
        off += c["L"]
    shp_flat = jnp.concatenate(shp_parts)                     # (total_L,)
    ss_arr = jnp.stack(ss_vals)                               # (2*n_blocks,)

    # Position weights (posSlope*elu(-posMap)+1+1)/L, padded to max_P, one
    # column per block.  Parameter-only -> computed once per call.
    pw_cols = []
    for c, p in zip(cfgs, blocks):
        pm = p["posMap"].reshape(c["P"]).astype(jnp.float32)
        neg = -pm
        elu = jnp.where(neg > 0, neg, jnp.expm1(neg))
        w = (p["posSlope"] * elu + 2.0) * (1.0 / float(c["L"]))
        pw_cols.append(jnp.pad(w, (0, max_P - c["P"])))
    posw = jnp.stack(pw_cols, axis=1)                         # (max_P, n_blocks)

    # Window groups: blocks sharing (channel, L, dilation) share window stats.
    wgroups = {}
    for c in cfgs:
        key = (chan_map[c["m"]], c["L"], c["dil"])
        wgroups.setdefault(key, []).append(
            (c["g"], c["st"], c["eps"], offs[c["g"]]))
    window_groups = tuple((cl, L, d, tuple(e))
                          for (cl, L, d), e in wgroups.items())

    # ---- batch layout: batch on lanes -----------------------------------
    live_rows = max(3 + len(e) for (_, _, _, e) in window_groups)
    vmem_limit = _vmem_limit_bytes()
    tile_b, padded_B = _pick_tile_b(B, C_used, Q, live_rows, n_blocks, vmem_limit)
    n_tiles = padded_B // tile_b

    x_f32 = x.astype(jnp.float32)
    x_sel = x_f32 if unique_ms == list(range(C)) else x_f32[:, jnp.array(unique_ms), :]
    x_t = jnp.transpose(x_sel, (1, 2, 0))                     # (C_used, Q, B)
    if padded_B != B:
        x_t = jnp.pad(x_t, ((0, 0), (0, 0), (0, padded_B - B)))

    kernel = functools.partial(_fused_kernel, Q=Q, window_groups=window_groups)

    # Advisory cost estimate (VPU-bound; MXU unused since L << 128).
    flops = 0
    transcendentals = 0
    for (_cl, L, dil, entries) in window_groups:
        P = Q - (L - 1) * dil
        flops += padded_B * P * (L * (4 + 2 * len(entries)) + 10 * len(entries))
        if any(st == 2 for (_g, st, _e, _o) in entries):
            transcendentals += padded_B * P
    bytes_accessed = 4 * (C_used * padded_B * Q + max_P * n_blocks
                          + n_blocks * padded_B)

    out = pl.pallas_call(
        kernel,
        out_shape=jax.ShapeDtypeStruct((n_blocks, padded_B), jnp.float32),
        grid_spec=pltpu.PrefetchScalarGridSpec(
            num_scalar_prefetch=0,
            grid=(n_tiles,),
            in_specs=[
                pl.BlockSpec(memory_space=pltpu.MemorySpace.SMEM),   # shapelets
                pl.BlockSpec(memory_space=pltpu.MemorySpace.SMEM),   # sum(s), sum(s^2)
                pl.BlockSpec((C_used, Q, tile_b), lambda i: (0, 0, i)),   # x
                pl.BlockSpec((max_P, n_blocks), lambda i: (0, 0)),        # pos weights
            ],
            out_specs=pl.BlockSpec((n_blocks, tile_b), lambda i: (0, i)),
        ),
        compiler_params=pltpu.CompilerParams(
            dimension_semantics=("parallel",),   # v7x: shard batch tiles over 2 TCs
            vmem_limit_bytes=vmem_limit,
        ),
        cost_estimate=pl.CostEstimate(flops=int(flops),
                                      transcendentals=int(transcendentals),
                                      bytes_accessed=int(bytes_accessed)),
    )(shp_flat, ss_arr, x_t, posw)

    # (n_blocks, padded_B) -> (B, 1, n_blocks); block order already original.
    return jnp.transpose(out)[:B].reshape(B, 1, n_blocks)


def _reference_forward(x, blocks):
    """Pure-JAX reference reproducing the PyTorch forward for verification."""
    outs = []
    for p in blocks:
        m, d, st, eps = p["m"], p["dilation"], p["scaleType"], p["eps"]
        L = p["shapelet"].shape[-1]
        B, C, Q = x.shape
        P = Q - (L - 1) * d
        xc = x[:, m, :]
        idx = jnp.arange(P)[:, None] + jnp.arange(L)[None, :] * d
        xu = xc[:, idx]                                       # (B, P, L)
        if st == 2:
            mean = xu.mean(axis=2, keepdims=True)
            std = jnp.std(xu, axis=2, ddof=1, keepdims=True)
            xu = (xu - mean) / (std + eps)
        elif st == 1:
            xu = xu - xu.mean(axis=2, keepdims=True)
        dseg = jnp.mean((p["shapelet"].reshape(1, 1, L) - xu) ** 2, axis=2)
        neg = -p["posMap"]
        elu = jnp.where(neg > 0, neg, jnp.expm1(neg))
        w = p["posSlope"] * elu + 2.0
        ftrs = dseg * w.reshape(1, P)
        agg = jnp.maximum(jnp.min(ftrs, axis=1), 0.0)
        outs.append(agg[:, None])
    out = jnp.concatenate(outs, axis=1)
    return out.reshape(out.shape[0], 1, out.shape[1])


if __name__ == "__main__":
    B, C, Q = 2, 4, 32
    key = jax.random.PRNGKey(0)
    keys = jax.random.split(key, 20)
    x = jax.random.normal(keys[0], (B, C, Q), dtype=jnp.float32)

    # Eight FeatureBlocks spanning several (channel, L, dilation, scaleType)
    # combinations; blocks 6 and 7 share their (channel, L, dilation) with
    # blocks 0 and 2 so the shared-window-statistics path is exercised.
    specs = [
        dict(L=5, dilation=1, scaleType=0, m=0),
        dict(L=5, dilation=2, scaleType=1, m=1),
        dict(L=3, dilation=3, scaleType=2, m=2),
        dict(L=5, dilation=1, scaleType=0, m=2),
        dict(L=5, dilation=2, scaleType=1, m=3),
        dict(L=3, dilation=3, scaleType=2, m=0),
        dict(L=5, dilation=1, scaleType=1, m=0),   # shares window stats w/ block 0
        dict(L=3, dilation=3, scaleType=2, m=2),   # shares window stats w/ block 2
    ]
    scale_eps = 1e-5
    blocks = []
    for i, s in enumerate(specs):
        P = Q - (s["L"] - 1) * s["dilation"]
        blocks.append(dict(
            shapelet=jax.random.normal(keys[1 + i], (s["L"],), dtype=jnp.float32),
            posMap=0.5 * jax.random.normal(keys[9 + i], (P,), dtype=jnp.float32),
            posSlope=1.0,
            m=s["m"],
            dilation=s["dilation"],
            scaleType=s["scaleType"],
            eps=scale_eps,
        ))

    out = shapelet_layer_forward(x, blocks, ep=0)
    out = jax.block_until_ready(out)

    ref = _reference_forward(x, blocks)
    assert out.shape == (B, 1, len(blocks)), out.shape
    assert jnp.allclose(out, ref, atol=2e-4, rtol=2e-4), (out, ref)

    print("KERNEL_OK")
</pallas_src>

<mosaic_0001>
module attributes {stable_mosaic.version = 11 : i64} {
  func.func @_fused_kernel(%arg0: i32, %arg1: memref<34xf32, #tpu.memory_space<smem>>, %arg2: memref<16xf32, #tpu.memory_space<smem>>, %arg3: memref<4x32x128xf32, #tpu.memory_space<vmem>>, %arg4: memref<28x8xf32, #tpu.memory_space<vmem>>, %arg5: memref<8x128xf32, #tpu.memory_space<vmem>>) attributes {dimension_semantics = [#tpu.dimension_semantics<parallel>], iteration_bounds = array<i64: 1>, scalar_prefetch = 0 : i64, scratch_operands = 0 : i64, tpu.core_type = #tpu.core_type<tc>, window_params = [{transform_indices = @transform_0, window_bounds = array<i64: 34>}, {transform_indices = @transform_1, window_bounds = array<i64: 16>}, {transform_indices = @transform_2, window_bounds = array<i64: 4, 32, 128>}, {pipeline_mode = #tpu.pipeline_mode<synchronous>, transform_indices = @transform_3, window_bounds = array<i64: 28, 8>}, {transform_indices = @transform_4, window_bounds = array<i64: 8, 128>}]} {
    %c0 = arith.constant 0 : index
    %0 = memref.load %arg1[%c0] : memref<34xf32, #tpu.memory_space<smem>>
    %c1 = arith.constant 1 : index
    %1 = memref.load %arg1[%c1] : memref<34xf32, #tpu.memory_space<smem>>
    %c2 = arith.constant 2 : index
    %2 = memref.load %arg1[%c2] : memref<34xf32, #tpu.memory_space<smem>>
    %c3 = arith.constant 3 : index
    %3 = memref.load %arg1[%c3] : memref<34xf32, #tpu.memory_space<smem>>
    %c4 = arith.constant 4 : index
    %4 = memref.load %arg1[%c4] : memref<34xf32, #tpu.memory_space<smem>>
    %c26 = arith.constant 26 : index
    %5 = memref.load %arg1[%c26] : memref<34xf32, #tpu.memory_space<smem>>
    %c27 = arith.constant 27 : index
    %6 = memref.load %arg1[%c27] : memref<34xf32, #tpu.memory_space<smem>>
    %c28 = arith.constant 28 : index
    %7 = memref.load %arg1[%c28] : memref<34xf32, #tpu.memory_space<smem>>
    %c29 = arith.constant 29 : index
    %8 = memref.load %arg1[%c29] : memref<34xf32, #tpu.memory_space<smem>>
    %c30 = arith.constant 30 : index
    %9 = memref.load %arg1[%c30] : memref<34xf32, #tpu.memory_space<smem>>
    %c0_0 = arith.constant 0 : index
    %c0_1 = arith.constant 0 : index
    %c0_2 = arith.constant 0 : index
    %10 = vector.load %arg3[%c0_0, %c0_1, %c0_2] : memref<4x32x128xf32, #tpu.memory_space<vmem>>, vector<1x28x128xf32>
    %11 = vector.shape_cast %10 : vector<1x28x128xf32> to vector<28x128xf32>
    %12 = arith.mulf %11, %11 : vector<28x128xf32>
    %13 = vector.broadcast %0 : f32 to vector<28x128xf32>
    %14 = arith.mulf %13, %11 : vector<28x128xf32>
    %15 = vector.broadcast %5 : f32 to vector<28x128xf32>
    %16 = arith.mulf %15, %11 : vector<28x128xf32>
    %c0_3 = arith.constant 0 : index
    %c1_4 = arith.constant 1 : index
    %c0_5 = arith.constant 0 : index
    %17 = vector.load %arg3[%c0_3, %c1_4, %c0_5] : memref<4x32x128xf32, #tpu.memory_space<vmem>>, vector<1x28x128xf32>
    %18 = vector.shape_cast %17 : vector<1x28x128xf32> to vector<28x128xf32>
    %19 = arith.mulf %18, %18 : vector<28x128xf32>
    %20 = arith.addf %12, %19 : vector<28x128xf32>
    %21 = arith.addf %11, %18 : vector<28x128xf32>
    %22 = vector.broadcast %1 : f32 to vector<28x128xf32>
    %23 = arith.mulf %22, %18 : vector<28x128xf32>
    %24 = arith.addf %14, %23 : vector<28x128xf32>
    %25 = vector.broadcast %6 : f32 to vector<28x128xf32>
    %26 = arith.mulf %25, %18 : vector<28x128xf32>
    %27 = arith.addf %16, %26 : vector<28x128xf32>
    %c0_6 = arith.constant 0 : index
    %c2_7 = arith.constant 2 : index
    %c0_8 = arith.constant 0 : index
    %28 = vector.load %arg3[%c0_6, %c2_7, %c0_8] : memref<4x32x128xf32, #tpu.memory_space<vmem>>, vector<1x28x128xf32>
    %29 = vector.shape_cast %28 : vector<1x28x128xf32> to vector<28x128xf32>
    %30 = arith.mulf %29, %29 : vector<28x128xf32>
    %31 = arith.addf %20, %30 : vector<28x128xf32>
    %32 = arith.addf %21, %29 : vector<28x128xf32>
    %33 = vector.broadcast %2 : f32 to vector<28x128xf32>
    %34 = arith.mulf %33, %29 : vector<28x128xf32>
    %35 = arith.addf %24, %34 : vector<28x128xf32>
    %36 = vector.broadcast %7 : f32 to vector<28x128xf32>
    %37 = arith.mulf %36, %29 : vector<28x128xf32>
    %38 = arith.addf %27, %37 : vector<28x128xf32>
    %c0_9 = arith.constant 0 : index
    %c3_10 = arith.constant 3 : index
    %c0_11 = arith.constant 0 : index
    %39 = vector.load %arg3[%c0_9, %c3_10, %c0_11] : memref<4x32x128xf32, #tpu.memory_space<vmem>>, vector<1x28x128xf32>
    %40 = vector.shape_cast %39 : vector<1x28x128xf32> to vector<28x128xf32>
    %41 = arith.mulf %40, %40 : vector<28x128xf32>
    %42 = arith.addf %31, %41 : vector<28x128xf32>
    %43 = arith.addf %32, %40 : vector<28x128xf32>
    %44 = vector.broadcast %3 : f32 to vector<28x128xf32>
    %45 = arith.mulf %44, %40 : vector<28x128xf32>
    %46 = arith.addf %35, %45 : vector<28x128xf32>
    %47 = vector.broadcast %8 : f32 to vector<28x128xf32>
    %48 = arith.mulf %47, %40 : vector<28x128xf32>
    %49 = arith.addf %38, %48 : vector<28x128xf32>
    %c0_12 = arith.constant 0 : index
    %c4_13 = arith.constant 4 : index
    %c0_14 = arith.constant 0 : index
    %50 = vector.load %arg3[%c0_12, %c4_13, %c0_14] : memref<4x32x128xf32, #tpu.memory_space<vmem>>, vector<1x28x128xf32>
    %51 = vector.shape_cast %50 : vector<1x28x128xf32> to vector<28x128xf32>
    %52 = arith.mulf %51, %51 : vector<28x128xf32>
    %53 = arith.addf %42, %52 : vector<28x128xf32>
    %54 = arith.addf %43, %51 : vector<28x128xf32>
    %55 = vector.broadcast %4 : f32 to vector<28x128xf32>
    %56 = arith.mulf %55, %51 : vector<28x128xf32>
    %57 = arith.addf %46, %56 : vector<28x128xf32>
    %58 = vector.broadcast %9 : f32 to vector<28x128xf32>
    %59 = arith.mulf %58, %51 : vector<28x128xf32>
    %60 = arith.addf %49, %59 : vector<28x128xf32>
    %cst = arith.constant 2.000000e-01 : f32
    %61 = vector.broadcast %cst : f32 to vector<28x128xf32>
    %62 = arith.mulf %54, %61 : vector<28x128xf32>
    %cst_15 = arith.constant 5.000000e+00 : f32
    %63 = vector.broadcast %cst_15 : f32 to vector<28x128xf32>
    %64 = arith.mulf %63, %62 : vector<28x128xf32>
    %65 = arith.mulf %64, %62 : vector<28x128xf32>
    %66 = arith.subf %53, %65 : vector<28x128xf32>
    %c1_16 = arith.constant 1 : index
    %67 = memref.load %arg2[%c1_16] : memref<16xf32, #tpu.memory_space<smem>>
    %cst_17 = arith.constant 2.000000e+00 : f32
    %68 = vector.broadcast %cst_17 : f32 to vector<28x128xf32>
    %69 = arith.mulf %68, %57 : vector<28x128xf32>
    %70 = vector.broadcast %67 : f32 to vector<28x128xf32>
    %71 = arith.subf %70, %69 : vector<28x128xf32>
    %72 = arith.addf %71, %53 : vector<28x128xf32>
    %c0_18 = arith.constant 0 : index
    %c0_19 = arith.constant 0 : index
    %73 = vector.load %arg4[%c0_18, %c0_19] : memref<28x8xf32, #tpu.memory_space<vmem>>, vector<28x1xf32>
    %74 = vector.broadcast %73 : vector<28x1xf32> to vector<28x128xf32>
    %75 = arith.mulf %72, %74 : vector<28x128xf32>
    %cst_20 = arith.constant dense<0x7F800000> : vector<128xf32>
    %76 = vector.multi_reduction <minimumf>, %75, %cst_20 [0] : vector<28x128xf32> to vector<128xf32>
    %cst_21 = arith.constant 0.000000e+00 : f32
    %77 = vector.broadcast %cst_21 : f32 to vector<128xf32>
    %78 = arith.maximumf %76, %77 : vector<128xf32>
    %c0_22 = arith.constant 0 : index
    %c0_23 = arith.constant 0 : index
    %79 = vector.load %arg5[%c0_22, %c0_23] : memref<8x128xf32, #tpu.memory_space<vmem>>, vector<1x128xf32>
    %80 = vector.shape_cast %79 : vector<1x128xf32> to vector<128xf32>
    %81 = vector.shape_cast %78 : vector<128xf32> to vector<1x128xf32>
    tpu.vector_store %arg5[%c0_22, %c0_23], %81 {strides = array<i32>} : memref<8x128xf32, #tpu.memory_space<vmem>>, vector<1x128xf32>,
    %c12 = arith.constant 12 : index
    %82 = memref.load %arg2[%c12] : memref<16xf32, #tpu.memory_space<smem>>
    %c13 = arith.constant 13 : index
    %83 = memref.load %arg2[%c13] : memref<16xf32, #tpu.memory_space<smem>>
    %cst_24 = arith.constant 2.000000e+00 : f32
    %84 = vector.broadcast %cst_24 : f32 to vector<28x128xf32>
    %85 = arith.mulf %84, %60 : vector<28x128xf32>
    %86 = vector.broadcast %83 : f32 to vector<28x128xf32>
    %87 = arith.subf %86, %85 : vector<28x128xf32>
    %cst_25 = arith.constant 2.000000e+00 : f32
    %88 = vector.broadcast %cst_25 : f32 to vector<28x128xf32>
    %89 = arith.mulf %88, %62 : vector<28x128xf32>
    %90 = vector.broadcast %82 : f32 to vector<28x128xf32>
    %91 = arith.mulf %89, %90 : vector<28x128xf32>
    %92 = arith.addf %87, %91 : vector<28x128xf32>
    %93 = arith.addf %92, %66 : vector<28x128xf32>
    %c0_26 = arith.constant 0 : index
    %c6 = arith.constant 6 : index
    %94 = vector.load %arg4[%c0_26, %c6] : memref<28x8xf32, #tpu.memory_space<vmem>>, vector<28x1xf32>
    %95 = vector.broadcast %94 : vector<28x1xf32> to vector<28x128xf32>
    %96 = arith.mulf %93, %95 : vector<28x128xf32>
    %cst_27 = arith.constant dense<0x7F800000> : vector<128xf32>
    %97 = vector.multi_reduction <minimumf>, %96, %cst_27 [0] : vector<28x128xf32> to vector<128xf32>
    %cst_28 = arith.constant 0.000000e+00 : f32
    %98 = vector.broadcast %cst_28 : f32 to vector<128xf32>
    %99 = arith.maximumf %97, %98 : vector<128xf32>
    %c6_29 = arith.constant 6 : index
    %c0_30 = arith.constant 0 : index
    %100 = vector.load %arg5[%c6_29, %c0_30] : memref<8x128xf32, #tpu.memory_space<vmem>>, vector<1x128xf32>
    %101 = vector.shape_cast %100 : vector<1x128xf32> to vector<128xf32>
    %102 = vector.shape_cast %99 : vector<128xf32> to vector<1x128xf32>
    tpu.vector_store %arg5[%c6_29, %c0_30], %102 {strides = array<i32>} : memref<8x128xf32, #tpu.memory_space<vmem>>, vector<1x128xf32>,
    %c5 = arith.constant 5 : index
    %103 = memref.load %arg1[%c5] : memref<34xf32, #tpu.memory_space<smem>>
    %c6_31 = arith.constant 6 : index
    %104 = memref.load %arg1[%c6_31] : memref<34xf32, #tpu.memory_space<smem>>
    %c7 = arith.constant 7 : index
    %105 = memref.load %arg1[%c7] : memref<34xf32, #tpu.memory_space<smem>>
    %c8 = arith.constant 8 : index
    %106 = memref.load %arg1[%c8] : memref<34xf32, #tpu.memory_space<smem>>
    %c9 = arith.constant 9 : index
    %107 = memref.load %arg1[%c9] : memref<34xf32, #tpu.memory_space<smem>>
    %c1_32 = arith.constant 1 : index
    %c0_33 = arith.constant 0 : index
    %c0_34 = arith.constant 0 : index
    %108 = vector.load %arg3[%c1_32, %c0_33, %c0_34] : memref<4x32x128xf32, #tpu.memory_space<vmem>>, vector<1x24x128xf32>
    %109 = vector.shape_cast %108 : vector<1x24x128xf32> to vector<24x128xf32>
    %110 = arith.mulf %109, %109 : vector<24x128xf32>
    %111 = vector.broadcast %103 : f32 to vector<24x128xf32>
    %112 = arith.mulf %111, %109 : vector<24x128xf32>
    %c1_35 = arith.constant 1 : index
    %c2_36 = arith.constant 2 : index
    %c0_37 = arith.constant 0 : index
    %113 = vector.load %arg3[%c1_35, %c2_36, %c0_37] : memref<4x32x128xf32, #tpu.memory_space<vmem>>, vector<1x24x128xf32>
    %114 = vector.shape_cast %113 : vector<1x24x128xf32> to vector<24x128xf32>
    %115 = arith.mulf %114, %114 : vector<24x128xf32>
    %116 = arith.addf %110, %115 : vector<24x128xf32>
    %117 = arith.addf %109, %114 : vector<24x128xf32>
    %118 = vector.broadcast %104 : f32 to vector<24x128xf32>
    %119 = arith.mulf %118, %114 : vector<24x128xf32>
    %120 = arith.addf %112, %119 : vector<24x128xf32>
    %c1_38 = arith.constant 1 : index
    %c4_39 = arith.constant 4 : index
    %c0_40 = arith.constant 0 : index
    %121 = vector.load %arg3[%c1_38, %c4_39, %c0_40] : memref<4x32x128xf32, #tpu.memory_space<vmem>>, vector<1x24x128xf32>
    %122 = vector.shape_cast %121 : vector<1x24x128xf32> to vector<24x128xf32>
    %123 = arith.mulf %122, %122 : vector<24x128xf32>
    %124 = arith.addf %116, %123 : vector<24x128xf32>
    %125 = arith.addf %117, %122 : vector<24x128xf32>
    %126 = vector.broadcast %105 : f32 to vector<24x128xf32>
    %127 = arith.mulf %126, %122 : vector<24x128xf32>
    %128 = arith.addf %120, %127 : vector<24x128xf32>
    %c1_41 = arith.constant 1 : index
    %c6_42 = arith.constant 6 : index
    %c0_43 = arith.constant 0 : index
    %129 = vector.load %arg3[%c1_41, %c6_42, %c0_43] : memref<4x32x128xf32, #tpu.memory_space<vmem>>, vector<1x24x128xf32>
    %130 = vector.shape_cast %129 : vector<1x24x128xf32> to vector<24x128xf32>
    %131 = arith.mulf %130, %130 : vector<24x128xf32>
    %132 = arith.addf %124, %131 : vector<24x128xf32>
    %133 = arith.addf %125, %130 : vector<24x128xf32>
    %134 = vector.broadcast %106 : f32 to vector<24x128xf32>
    %135 = arith.mulf %134, %130 : vector<24x128xf32>
    %136 = arith.addf %128, %135 : vector<24x128xf32>
    %c1_44 = arith.constant 1 : index
    %c8_45 = arith.constant 8 : index
    %c0_46 = arith.constant 0 : index
    %137 = vector.load %arg3[%c1_44, %c8_45, %c0_46] : memref<4x32x128xf32, #tpu.memory_space<vmem>>, vector<1x24x128xf32>
    %138 = vector.shape_cast %137 : vector<1x24x128xf32> to vector<24x128xf32>
    %139 = arith.mulf %138, %138 : vector<24x128xf32>
    %140 = arith.addf %132, %139 : vector<24x128xf32>
    %141 = arith.addf %133, %138 : vector<24x128xf32>
    %142 = vector.broadcast %107 : f32 to vector<24x128xf32>
    %143 = arith.mulf %142, %138 : vector<24x128xf32>
    %144 = arith.addf %136, %143 : vector<24x128xf32>
    %cst_47 = arith.constant 2.000000e-01 : f32
    %145 = vector.broadcast %cst_47 : f32 to vector<24x128xf32>
    %146 = arith.mulf %141, %145 : vector<24x128xf32>
    %cst_48 = arith.constant 5.000000e+00 : f32
    %147 = vector.broadcast %cst_48 : f32 to vector<24x128xf32>
    %148 = arith.mulf %147, %146 : vector<24x128xf32>
    %149 = arith.mulf %148, %146 : vector<24x128xf32>
    %150 = arith.subf %140, %149 : vector<24x128xf32>
    %c2_49 = arith.constant 2 : index
    %151 = memref.load %arg2[%c2_49] : memref<16xf32, #tpu.memory_space<smem>>
    %c3_50 = arith.constant 3 : index
    %152 = memref.load %arg2[%c3_50] : memref<16xf32, #tpu.memory_space<smem>>
    %cst_51 = arith.constant 2.000000e+00 : f32
    %153 = vector.broadcast %cst_51 : f32 to vector<24x128xf32>
    %154 = arith.mulf %153, %144 : vector<24x128xf32>
    %155 = vector.broadcast %152 : f32 to vector<24x128xf32>
    %156 = arith.subf %155, %154 : vector<24x128xf32>
    %cst_52 = arith.constant 2.000000e+00 : f32
    %157 = vector.broadcast %cst_52 : f32 to vector<24x128xf32>
    %158 = arith.mulf %157, %146 : vector<24x128xf32>
    %159 = vector.broadcast %151 : f32 to vector<24x128xf32>
    %160 = arith.mulf %158, %159 : vector<24x128xf32>
    %161 = arith.addf %156, %160 : vector<24x128xf32>
    %162 = arith.addf %161, %150 : vector<24x128xf32>
    %c0_53 = arith.constant 0 : index
    %c1_54 = arith.constant 1 : index
    %163 = vector.load %arg4[%c0_53, %c1_54] : memref<28x8xf32, #tpu.memory_space<vmem>>, vector<24x1xf32>
    %164 = vector.broadcast %163 : vector<24x1xf32> to vector<24x128xf32>
    %165 = arith.mulf %162, %164 : vector<24x128xf32>
    %cst_55 = arith.constant dense<0x7F800000> : vector<128xf32>
    %166 = vector.multi_reduction <minimumf>, %165, %cst_55 [0] : vector<24x128xf32> to vector<128xf32>
    %cst_56 = arith.constant 0.000000e+00 : f32
    %167 = vector.broadcast %cst_56 : f32 to vector<128xf32>
    %168 = arith.maximumf %166, %167 : vector<128xf32>
    %c1_57 = arith.constant 1 : index
    %c0_58 = arith.constant 0 : index
    %169 = vector.load %arg5[%c1_57, %c0_58] : memref<8x128xf32, #tpu.memory_space<vmem>>, vector<1x128xf32>
    %170 = vector.shape_cast %169 : vector<1x128xf32> to vector<128xf32>
    %171 = vector.shape_cast %168 : vector<128xf32> to vector<1x128xf32>
    tpu.vector_store %arg5[%c1_57, %c0_58], %171 {strides = array<i32>} : memref<8x128xf32, #tpu.memory_space<vmem>>, vector<1x128xf32>,
    %c10 = arith.constant 10 : index
    %172 = memref.load %arg1[%c10] : memref<34xf32, #tpu.memory_space<smem>>
    %c11 = arith.constant 11 : index
    %173 = memref.load %arg1[%c11] : memref<34xf32, #tpu.memory_space<smem>>
    %c12_59 = arith.constant 12 : index
    %174 = memref.load %arg1[%c12_59] : memref<34xf32, #tpu.memory_space<smem>>
    %c31 = arith.constant 31 : index
    %175 = memref.load %arg1[%c31] : memref<34xf32, #tpu.memory_space<smem>>
    %c32 = arith.constant 32 : index
    %176 = memref.load %arg1[%c32] : memref<34xf32, #tpu.memory_space<smem>>
    %c33 = arith.constant 33 : index
    %177 = memref.load %arg1[%c33] : memref<34xf32, #tpu.memory_space<smem>>
    %c2_60 = arith.constant 2 : index
    %c0_61 = arith.constant 0 : index
    %c0_62 = arith.constant 0 : index
    %178 = vector.load %arg3[%c2_60, %c0_61, %c0_62] : memref<4x32x128xf32, #tpu.memory_space<vmem>>, vector<1x26x128xf32>
    %179 = vector.shape_cast %178 : vector<1x26x128xf32> to vector<26x128xf32>
    %180 = arith.mulf %179, %179 : vector<26x128xf32>
    %181 = vector.broadcast %172 : f32 to vector<26x128xf32>
    %182 = arith.mulf %181, %179 : vector<26x128xf32>
    %183 = vector.broadcast %175 : f32 to vector<26x128xf32>
    %184 = arith.mulf %183, %179 : vector<26x128xf32>
    %c2_63 = arith.constant 2 : index
    %c3_64 = arith.constant 3 : index
    %c0_65 = arith.constant 0 : index
    %185 = vector.load %arg3[%c2_63, %c3_64, %c0_65] : memref<4x32x128xf32, #tpu.memory_space<vmem>>, vector<1x26x128xf32>
    %186 = vector.shape_cast %185 : vector<1x26x128xf32> to vector<26x128xf32>
    %187 = arith.mulf %186, %186 : vector<26x128xf32>
    %188 = arith.addf %180, %187 : vector<26x128xf32>
    %189 = arith.addf %179, %186 : vector<26x128xf32>
    %190 = vector.broadcast %173 : f32 to vector<26x128xf32>
    %191 = arith.mulf %190, %186 : vector<26x128xf32>
    %192 = arith.addf %182, %191 : vector<26x128xf32>
    %193 = vector.broadcast %176 : f32 to vector<26x128xf32>
    %194 = arith.mulf %193, %186 : vector<26x128xf32>
    %195 = arith.addf %184, %194 : vector<26x128xf32>
    %c2_66 = arith.constant 2 : index
    %c6_67 = arith.constant 6 : index
    %c0_68 = arith.constant 0 : index
    %196 = vector.load %arg3[%c2_66, %c6_67, %c0_68] : memref<4x32x128xf32, #tpu.memory_space<vmem>>, vector<1x26x128xf32>
    %197 = vector.shape_cast %196 : vector<1x26x128xf32> to vector<26x128xf32>
    %198 = arith.mulf %197, %197 : vector<26x128xf32>
    %199 = arith.addf %188, %198 : vector<26x128xf32>
    %200 = arith.addf %189, %197 : vector<26x128xf32>
    %201 = vector.broadcast %174 : f32 to vector<26x128xf32>
    %202 = arith.mulf %201, %197 : vector<26x128xf32>
    %203 = arith.addf %192, %202 : vector<26x128xf32>
    %204 = vector.broadcast %177 : f32 to vector<26x128xf32>
    %205 = arith.mulf %204, %197 : vector<26x128xf32>
    %206 = arith.addf %195, %205 : vector<26x128xf32>
    %cst_69 = arith.constant 0.333333343 : f32
    %207 = vector.broadcast %cst_69 : f32 to vector<26x128xf32>
    %208 = arith.mulf %200, %207 : vector<26x128xf32>
    %cst_70 = arith.constant 3.000000e+00 : f32
    %209 = vector.broadcast %cst_70 : f32 to vector<26x128xf32>
    %210 = arith.mulf %209, %208 : vector<26x128xf32>
    %211 = arith.mulf %210, %208 : vector<26x128xf32>
    %212 = arith.subf %199, %211 : vector<26x128xf32>
    %cst_71 = arith.constant 5.000000e-01 : f32
    %213 = vector.broadcast %cst_71 : f32 to vector<26x128xf32>
    %214 = arith.mulf %212, %213 : vector<26x128xf32>
    %cst_72 = arith.constant 0.000000e+00 : f32
    %215 = vector.broadcast %cst_72 : f32 to vector<26x128xf32>
    %216 = arith.maximumf %214, %215 : vector<26x128xf32>
    %217 = math.sqrt %216 : vector<26x128xf32>
    %c4_73 = arith.constant 4 : index
    %218 = memref.load %arg2[%c4_73] : memref<16xf32, #tpu.memory_space<smem>>
    %c5_74 = arith.constant 5 : index
    %219 = memref.load %arg2[%c5_74] : memref<16xf32, #tpu.memory_space<smem>>
    %cst_75 = arith.constant 9.99999974E-6 : f32
    %220 = vector.broadcast %cst_75 : f32 to vector<26x128xf32>
    %221 = arith.addf %217, %220 : vector<26x128xf32>
    %cst_76 = arith.constant 1.000000e+00 : f32
    %222 = vector.broadcast %cst_76 : f32 to vector<26x128xf32>
    %223 = arith.divf %222, %221 : vector<26x128xf32>
    %cst_77 = arith.constant 2.000000e+00 : f32
    %224 = vector.broadcast %cst_77 : f32 to vector<26x128xf32>
    %225 = arith.mulf %224, %223 : vector<26x128xf32>
    %226 = vector.broadcast %218 : f32 to vector<26x128xf32>
    %227 = arith.mulf %208, %226 : vector<26x128xf32>
    %228 = arith.subf %203, %227 : vector<26x128xf32>
    %229 = arith.mulf %225, %228 : vector<26x128xf32>
    %230 = vector.broadcast %219 : f32 to vector<26x128xf32>
    %231 = arith.subf %230, %229 : vector<26x128xf32>
    %232 = arith.mulf %223, %223 : vector<26x128xf32>
    %233 = arith.mulf %232, %212 : vector<26x128xf32>
    %234 = arith.addf %231, %233 : vector<26x128xf32>
    %c0_78 = arith.constant 0 : index
    %c2_79 = arith.constant 2 : index
    %235 = vector.load %arg4[%c0_78, %c2_79] : memref<28x8xf32, #tpu.memory_space<vmem>>, vector<26x1xf32>
    %236 = vector.broadcast %235 : vector<26x1xf32> to vector<26x128xf32>
    %237 = arith.mulf %234, %236 : vector<26x128xf32>
    %cst_80 = arith.constant dense<0x7F800000> : vector<128xf32>
    %238 = vector.multi_reduction <minimumf>, %237, %cst_80 [0] : vector<26x128xf32> to vector<128xf32>
    %cst_81 = arith.constant 0.000000e+00 : f32
    %239 = vector.broadcast %cst_81 : f32 to vector<128xf32>
    %240 = arith.maximumf %238, %239 : vector<128xf32>
    %c2_82 = arith.constant 2 : index
    %c0_83 = arith.constant 0 : index
    %241 = vector.load %arg5[%c2_82, %c0_83] : memref<8x128xf32, #tpu.memory_space<vmem>>, vector<1x128xf32>
    %242 = vector.shape_cast %241 : vector<1x128xf32> to vector<128xf32>
    %243 = vector.shape_cast %240 : vector<128xf32> to vector<1x128xf32>
    tpu.vector_store %arg5[%c2_82, %c0_83], %243 {strides = array<i32>} : memref<8x128xf32, #tpu.memory_space<vmem>>, vector<1x128xf32>,
    %c14 = arith.constant 14 : index
    %244 = memref.load %arg2[%c14] : memref<16xf32, #tpu.memory_space<smem>>
    %c15 = arith.constant 15 : index
    %245 = memref.load %arg2[%c15] : memref<16xf32, #tpu.memory_space<smem>>
    %cst_84 = arith.constant 2.000000e+00 : f32
    %246 = vector.broadcast %cst_84 : f32 to vector<26x128xf32>
    %247 = arith.mulf %246, %223 : vector<26x128xf32>
    %248 = vector.broadcast %244 : f32 to vector<26x128xf32>
    %249 = arith.mulf %208, %248 : vector<26x128xf32>
    %250 = arith.subf %206, %249 : vector<26x128xf32>
    %251 = arith.mulf %247, %250 : vector<26x128xf32>
    %252 = vector.broadcast %245 : f32 to vector<26x128xf32>
    %253 = arith.subf %252, %251 : vector<26x128xf32>
    %254 = arith.mulf %223, %223 : vector<26x128xf32>
    %255 = arith.mulf %254, %212 : vector<26x128xf32>
    %256 = arith.addf %253, %255 : vector<26x128xf32>
    %c0_85 = arith.constant 0 : index
    %c7_86 = arith.constant 7 : index
    %257 = vector.load %arg4[%c0_85, %c7_86] : memref<28x8xf32, #tpu.memory_space<vmem>>, vector<26x1xf32>
    %258 = vector.broadcast %257 : vector<26x1xf32> to vector<26x128xf32>
    %259 = arith.mulf %256, %258 : vector<26x128xf32>
    %cst_87 = arith.constant dense<0x7F800000> : vector<128xf32>
    %260 = vector.multi_reduction <minimumf>, %259, %cst_87 [0] : vector<26x128xf32> to vector<128xf32>
    %cst_88 = arith.constant 0.000000e+00 : f32
    %261 = vector.broadcast %cst_88 : f32 to vector<128xf32>
    %262 = arith.maximumf %260, %261 : vector<128xf32>
    %c7_89 = arith.constant 7 : index
    %c0_90 = arith.constant 0 : index
    %263 = vector.load %arg5[%c7_89, %c0_90] : memref<8x128xf32, #tpu.memory_space<vmem>>, vector<1x128xf32>
    %264 = vector.shape_cast %263 : vector<1x128xf32> to vector<128xf32>
    %265 = vector.shape_cast %262 : vector<128xf32> to vector<1x128xf32>
    tpu.vector_store %arg5[%c7_89, %c0_90], %265 {strides = array<i32>} : memref<8x128xf32, #tpu.memory_space<vmem>>, vector<1x128xf32>,
    %c13_91 = arith.constant 13 : index
    %266 = memref.load %arg1[%c13_91] : memref<34xf32, #tpu.memory_space<smem>>
    %c14_92 = arith.constant 14 : index
    %267 = memref.load %arg1[%c14_92] : memref<34xf32, #tpu.memory_space<smem>>
    %c15_93 = arith.constant 15 : index
    %268 = memref.load %arg1[%c15_93] : memref<34xf32, #tpu.memory_space<smem>>
    %c16 = arith.constant 16 : index
    %269 = memref.load %arg1[%c16] : memref<34xf32, #tpu.memory_space<smem>>
    %c17 = arith.constant 17 : index
    %270 = memref.load %arg1[%c17] : memref<34xf32, #tpu.memory_space<smem>>
    %c2_94 = arith.constant 2 : index
    %c0_95 = arith.constant 0 : index
    %c0_96 = arith.constant 0 : index
    %271 = vector.load %arg3[%c2_94, %c0_95, %c0_96] : memref<4x32x128xf32, #tpu.memory_space<vmem>>, vector<1x28x128xf32>
    %272 = vector.shape_cast %271 : vector<1x28x128xf32> to vector<28x128xf32>
    %273 = arith.mulf %272, %272 : vector<28x128xf32>
    %274 = vector.broadcast %266 : f32 to vector<28x128xf32>
    %275 = arith.mulf %274, %272 : vector<28x128xf32>
    %c2_97 = arith.constant 2 : index
    %c1_98 = arith.constant 1 : index
    %c0_99 = arith.constant 0 : index
    %276 = vector.load %arg3[%c2_97, %c1_98, %c0_99] : memref<4x32x128xf32, #tpu.memory_space<vmem>>, vector<1x28x128xf32>
    %277 = vector.shape_cast %276 : vector<1x28x128xf32> to vector<28x128xf32>
    %278 = arith.mulf %277, %277 : vector<28x128xf32>
    %279 = arith.addf %273, %278 : vector<28x128xf32>
    %280 = vector.broadcast %267 : f32 to vector<28x128xf32>
    %281 = arith.mulf %280, %277 : vector<28x128xf32>
    %282 = arith.addf %275, %281 : vector<28x128xf32>
    %c2_100 = arith.constant 2 : index
    %c2_101 = arith.constant 2 : index
    %c0_102 = arith.constant 0 : index
    %283 = vector.load %arg3[%c2_100, %c2_101, %c0_102] : memref<4x32x128xf32, #tpu.memory_space<vmem>>, vector<1x28x128xf32>
    %284 = vector.shape_cast %283 : vector<1x28x128xf32> to vector<28x128xf32>
    %285 = arith.mulf %284, %284 : vector<28x128xf32>
    %286 = arith.addf %279, %285 : vector<28x128xf32>
    %287 = vector.broadcast %268 : f32 to vector<28x128xf32>
    %288 = arith.mulf %287, %284 : vector<28x128xf32>
    %289 = arith.addf %282, %288 : vector<28x128xf32>
    %c2_103 = arith.constant 2 : index
    %c3_104 = arith.constant 3 : index
    %c0_105 = arith.constant 0 : index
    %290 = vector.load %arg3[%c2_103, %c3_104, %c0_105] : memref<4x32x128xf32, #tpu.memory_space<vmem>>, vector<1x28x128xf32>
    %291 = vector.shape_cast %290 : vector<1x28x128xf32> to vector<28x128xf32>
    %292 = arith.mulf %291, %291 : vector<28x128xf32>
    %293 = arith.addf %286, %292 : vector<28x128xf32>
    %294 = vector.broadcast %269 : f32 to vector<28x128xf32>
    %295 = arith.mulf %294, %291 : vector<28x128xf32>
    %296 = arith.addf %289, %295 : vector<28x128xf32>
    %c2_106 = arith.constant 2 : index
    %c4_107 = arith.constant 4 : index
    %c0_108 = arith.constant 0 : index
    %297 = vector.load %arg3[%c2_106, %c4_107, %c0_108] : memref<4x32x128xf32, #tpu.memory_space<vmem>>, vector<1x28x128xf32>
    %298 = vector.shape_cast %297 : vector<1x28x128xf32> to vector<28x128xf32>
    %299 = arith.mulf %298, %298 : vector<28x128xf32>
    %300 = arith.addf %293, %299 : vector<28x128xf32>
    %301 = vector.broadcast %270 : f32 to vector<28x128xf32>
    %302 = arith.mulf %301, %298 : vector<28x128xf32>
    %303 = arith.addf %296, %302 : vector<28x128xf32>
    %c7_109 = arith.constant 7 : index
    %304 = memref.load %arg2[%c7_109] : memref<16xf32, #tpu.memory_space<smem>>
    %cst_110 = arith.constant 2.000000e+00 : f32
    %305 = vector.broadcast %cst_110 : f32 to vector<28x128xf32>
    %306 = arith.mulf %305, %303 : vector<28x128xf32>
    %307 = vector.broadcast %304 : f32 to vector<28x128xf32>
    %308 = arith.subf %307, %306 : vector<28x128xf32>
    %309 = arith.addf %308, %300 : vector<28x128xf32>
    %c0_111 = arith.constant 0 : index
    %c3_112 = arith.constant 3 : index
    %310 = vector.load %arg4[%c0_111, %c3_112] : memref<28x8xf32, #tpu.memory_space<vmem>>, vector<28x1xf32>
    %311 = vector.broadcast %310 : vector<28x1xf32> to vector<28x128xf32>
    %312 = arith.mulf %309, %311 : vector<28x128xf32>
    %cst_113 = arith.constant dense<0x7F800000> : vector<128xf32>
    %313 = vector.multi_reduction <minimumf>, %312, %cst_113 [0] : vector<28x128xf32> to vector<128xf32>
    %cst_114 = arith.constant 0.000000e+00 : f32
    %314 = vector.broadcast %cst_114 : f32 to vector<128xf32>
    %315 = arith.maximumf %313, %314 : vector<128xf32>
    %c3_115 = arith.constant 3 : index
    %c0_116 = arith.constant 0 : index
    %316 = vector.load %arg5[%c3_115, %c0_116] : memref<8x128xf32, #tpu.memory_space<vmem>>, vector<1x128xf32>
    %317 = vector.shape_cast %316 : vector<1x128xf32> to vector<128xf32>
    %318 = vector.shape_cast %315 : vector<128xf32> to vector<1x128xf32>
    tpu.vector_store %arg5[%c3_115, %c0_116], %318 {strides = array<i32>} : memref<8x128xf32, #tpu.memory_space<vmem>>, vector<1x128xf32>,
    %c18 = arith.constant 18 : index
    %319 = memref.load %arg1[%c18] : memref<34xf32, #tpu.memory_space<smem>>
    %c19 = arith.constant 19 : index
    %320 = memref.load %arg1[%c19] : memref<34xf32, #tpu.memory_space<smem>>
    %c20 = arith.constant 20 : index
    %321 = memref.load %arg1[%c20] : memref<34xf32, #tpu.memory_space<smem>>
    %c21 = arith.constant 21 : index
    %322 = memref.load %arg1[%c21] : memref<34xf32, #tpu.memory_space<smem>>
    %c22 = arith.constant 22 : index
    %323 = memref.load %arg1[%c22] : memref<34xf32, #tpu.memory_space<smem>>
    %c3_117 = arith.constant 3 : index
    %c0_118 = arith.constant 0 : index
    %c0_119 = arith.constant 0 : index
    %324 = vector.load %arg3[%c3_117, %c0_118, %c0_119] : memref<4x32x128xf32, #tpu.memory_space<vmem>>, vector<1x24x128xf32>
    %325 = vector.shape_cast %324 : vector<1x24x128xf32> to vector<24x128xf32>
    %326 = arith.mulf %325, %325 : vector<24x128xf32>
    %327 = vector.broadcast %319 : f32 to vector<24x128xf32>
    %328 = arith.mulf %327, %325 : vector<24x128xf32>
    %c3_120 = arith.constant 3 : index
    %c2_121 = arith.constant 2 : index
    %c0_122 = arith.constant 0 : index
    %329 = vector.load %arg3[%c3_120, %c2_121, %c0_122] : memref<4x32x128xf32, #tpu.memory_space<vmem>>, vector<1x24x128xf32>
    %330 = vector.shape_cast %329 : vector<1x24x128xf32> to vector<24x128xf32>
    %331 = arith.mulf %330, %330 : vector<24x128xf32>
    %332 = arith.addf %326, %331 : vector<24x128xf32>
    %333 = arith.addf %325, %330 : vector<24x128xf32>
    %334 = vector.broadcast %320 : f32 to vector<24x128xf32>
    %335 = arith.mulf %334, %330 : vector<24x128xf32>
    %336 = arith.addf %328, %335 : vector<24x128xf32>
    %c3_123 = arith.constant 3 : index
    %c4_124 = arith.constant 4 : index
    %c0_125 = arith.constant 0 : index
    %337 = vector.load %arg3[%c3_123, %c4_124, %c0_125] : memref<4x32x128xf32, #tpu.memory_space<vmem>>, vector<1x24x128xf32>
    %338 = vector.shape_cast %337 : vector<1x24x128xf32> to vector<24x128xf32>
    %339 = arith.mulf %338, %338 : vector<24x128xf32>
    %340 = arith.addf %332, %339 : vector<24x128xf32>
    %341 = arith.addf %333, %338 : vector<24x128xf32>
    %342 = vector.broadcast %321 : f32 to vector<24x128xf32>
    %343 = arith.mulf %342, %338 : vector<24x128xf32>
    %344 = arith.addf %336, %343 : vector<24x128xf32>
    %c3_126 = arith.constant 3 : index
    %c6_127 = arith.constant 6 : index
    %c0_128 = arith.constant 0 : index
    %345 = vector.load %arg3[%c3_126, %c6_127, %c0_128] : memref<4x32x128xf32, #tpu.memory_space<vmem>>, vector<1x24x128xf32>
    %346 = vector.shape_cast %345 : vector<1x24x128xf32> to vector<24x128xf32>
    %347 = arith.mulf %346, %346 : vector<24x128xf32>
    %348 = arith.addf %340, %347 : vector<24x128xf32>
    %349 = arith.addf %341, %346 : vector<24x128xf32>
    %350 = vector.broadcast %322 : f32 to vector<24x128xf32>
    %351 = arith.mulf %350, %346 : vector<24x128xf32>
    %352 = arith.addf %344, %351 : vector<24x128xf32>
    %c3_129 = arith.constant 3 : index
    %c8_130 = arith.constant 8 : index
    %c0_131 = arith.constant 0 : index
    %353 = vector.load %arg3[%c3_129, %c8_130, %c0_131] : memref<4x32x128xf32, #tpu.memory_space<vmem>>, vector<1x24x128xf32>
    %354 = vector.shape_cast %353 : vector<1x24x128xf32> to vector<24x128xf32>
    %355 = arith.mulf %354, %354 : vector<24x128xf32>
    %356 = arith.addf %348, %355 : vector<24x128xf32>
    %357 = arith.addf %349, %354 : vector<24x128xf32>
    %358 = vector.broadcast %323 : f32 to vector<24x128xf32>
    %359 = arith.mulf %358, %354 : vector<24x128xf32>
    %360 = arith.addf %352, %359 : vector<24x128xf32>
    %cst_132 = arith.constant 2.000000e-01 : f32
    %361 = vector.broadcast %cst_132 : f32 to vector<24x128xf32>
    %362 = arith.mulf %357, %361 : vector<24x128xf32>
    %cst_133 = arith.constant 5.000000e+00 : f32
    %363 = vector.broadcast %cst_133 : f32 to vector<24x128xf32>
    %364 = arith.mulf %363, %362 : vector<24x128xf32>
    %365 = arith.mulf %364, %362 : vector<24x128xf32>
    %366 = arith.subf %356, %365 : vector<24x128xf32>
    %c8_134 = arith.constant 8 : index
    %367 = memref.load %arg2[%c8_134] : memref<16xf32, #tpu.memory_space<smem>>
    %c9_135 = arith.constant 9 : index
    %368 = memref.load %arg2[%c9_135] : memref<16xf32, #tpu.memory_space<smem>>
    %cst_136 = arith.constant 2.000000e+00 : f32
    %369 = vector.broadcast %cst_136 : f32 to vector<24x128xf32>
    %370 = arith.mulf %369, %360 : vector<24x128xf32>
    %371 = vector.broadcast %368 : f32 to vector<24x128xf32>
    %372 = arith.subf %371, %370 : vector<24x128xf32>
    %cst_137 = arith.constant 2.000000e+00 : f32
    %373 = vector.broadcast %cst_137 : f32 to vector<24x128xf32>
    %374 = arith.mulf %373, %362 : vector<24x128xf32>
    %375 = vector.broadcast %367 : f32 to vector<24x128xf32>
    %376 = arith.mulf %374, %375 : vector<24x128xf32>
    %377 = arith.addf %372, %376 : vector<24x128xf32>
    %378 = arith.addf %377, %366 : vector<24x128xf32>
    %c0_138 = arith.constant 0 : index
    %c4_139 = arith.constant 4 : index
    %379 = vector.load %arg4[%c0_138, %c4_139] : memref<28x8xf32, #tpu.memory_space<vmem>>, vector<24x1xf32>
    %380 = vector.broadcast %379 : vector<24x1xf32> to vector<24x128xf32>
    %381 = arith.mulf %378, %380 : vector<24x128xf32>
    %cst_140 = arith.constant dense<0x7F800000> : vector<128xf32>
    %382 = vector.multi_reduction <minimumf>, %381, %cst_140 [0] : vector<24x128xf32> to vector<128xf32>
    %cst_141 = arith.constant 0.000000e+00 : f32
    %383 = vector.broadcast %cst_141 : f32 to vector<128xf32>
    %384 = arith.maximumf %382, %383 : vector<128xf32>
    %c4_142 = arith.constant 4 : index
    %c0_143 = arith.constant 0 : index
    %385 = vector.load %arg5[%c4_142, %c0_143] : memref<8x128xf32, #tpu.memory_space<vmem>>, vector<1x128xf32>
    %386 = vector.shape_cast %385 : vector<1x128xf32> to vector<128xf32>
    %387 = vector.shape_cast %384 : vector<128xf32> to vector<1x128xf32>
    tpu.vector_store %arg5[%c4_142, %c0_143], %387 {strides = array<i32>} : memref<8x128xf32, #tpu.memory_space<vmem>>, vector<1x128xf32>,
    %c23 = arith.constant 23 : index
    %388 = memref.load %arg1[%c23] : memref<34xf32, #tpu.memory_space<smem>>
    %c24 = arith.constant 24 : index
    %389 = memref.load %arg1[%c24] : memref<34xf32, #tpu.memory_space<smem>>
    %c25 = arith.constant 25 : index
    %390 = memref.load %arg1[%c25] : memref<34xf32, #tpu.memory_space<smem>>
    %c0_144 = arith.constant 0 : index
    %c0_145 = arith.constant 0 : index
    %c0_146 = arith.constant 0 : index
    %391 = vector.load %arg3[%c0_144, %c0_145, %c0_146] : memref<4x32x128xf32, #tpu.memory_space<vmem>>, vector<1x26x128xf32>
    %392 = vector.shape_cast %391 : vector<1x26x128xf32> to vector<26x128xf32>
    %393 = arith.mulf %392, %392 : vector<26x128xf32>
    %394 = vector.broadcast %388 : f32 to vector<26x128xf32>
    %395 = arith.mulf %394, %392 : vector<26x128xf32>
    %c0_147 = arith.constant 0 : index
    %c3_148 = arith.constant 3 : index
    %c0_149 = arith.constant 0 : index
    %396 = vector.load %arg3[%c0_147, %c3_148, %c0_149] : memref<4x32x128xf32, #tpu.memory_space<vmem>>, vector<1x26x128xf32>
    %397 = vector.shape_cast %396 : vector<1x26x128xf32> to vector<26x128xf32>
    %398 = arith.mulf %397, %397 : vector<26x128xf32>
    %399 = arith.addf %393, %398 : vector<26x128xf32>
    %400 = arith.addf %392, %397 : vector<26x128xf32>
    %401 = vector.broadcast %389 : f32 to vector<26x128xf32>
    %402 = arith.mulf %401, %397 : vector<26x128xf32>
    %403 = arith.addf %395, %402 : vector<26x128xf32>
    %c0_150 = arith.constant 0 : index
    %c6_151 = arith.constant 6 : index
    %c0_152 = arith.constant 0 : index
    %404 = vector.load %arg3[%c0_150, %c6_151, %c0_152] : memref<4x32x128xf32, #tpu.memory_space<vmem>>, vector<1x26x128xf32>
    %405 = vector.shape_cast %404 : vector<1x26x128xf32> to vector<26x128xf32>
    %406 = arith.mulf %405, %405 : vector<26x128xf32>
    %407 = arith.addf %399, %406 : vector<26x128xf32>
    %408 = arith.addf %400, %405 : vector<26x128xf32>
    %409 = vector.broadcast %390 : f32 to vector<26x128xf32>
    %410 = arith.mulf %409, %405 : vector<26x128xf32>
    %411 = arith.addf %403, %410 : vector<26x128xf32>
    %cst_153 = arith.constant 0.333333343 : f32
    %412 = vector.broadcast %cst_153 : f32 to vector<26x128xf32>
    %413 = arith.mulf %408, %412 : vector<26x128xf32>
    %cst_154 = arith.constant 3.000000e+00 : f32
    %414 = vector.broadcast %cst_154 : f32 to vector<26x128xf32>
    %415 = arith.mulf %414, %413 : vector<26x128xf32>
    %416 = arith.mulf %415, %413 : vector<26x128xf32>
    %417 = arith.subf %407, %416 : vector<26x128xf32>
    %cst_155 = arith.constant 5.000000e-01 : f32
    %418 = vector.broadcast %cst_155 : f32 to vector<26x128xf32>
    %419 = arith.mulf %417, %418 : vector<26x128xf32>
    %cst_156 = arith.constant 0.000000e+00 : f32
    %420 = vector.broadcast %cst_156 : f32 to vector<26x128xf32>
    %421 = arith.maximumf %419, %420 : vector<26x128xf32>
    %422 = math.sqrt %421 : vector<26x128xf32>
    %c10_157 = arith.constant 10 : index
    %423 = memref.load %arg2[%c10_157] : memref<16xf32, #tpu.memory_space<smem>>
    %c11_158 = arith.constant 11 : index
    %424 = memref.load %arg2[%c11_158] : memref<16xf32, #tpu.memory_space<smem>>
    %cst_159 = arith.constant 9.99999974E-6 : f32
    %425 = vector.broadcast %cst_159 : f32 to vector<26x128xf32>
    %426 = arith.addf %422, %425 : vector<26x128xf32>
    %cst_160 = arith.constant 1.000000e+00 : f32
    %427 = vector.broadcast %cst_160 : f32 to vector<26x128xf32>
    %428 = arith.divf %427, %426 : vector<26x128xf32>
    %cst_161 = arith.constant 2.000000e+00 : f32
    %429 = vector.broadcast %cst_161 : f32 to vector<26x128xf32>
    %430 = arith.mulf %429, %428 : vector<26x128xf32>
    %431 = vector.broadcast %423 : f32 to vector<26x128xf32>
    %432 = arith.mulf %413, %431 : vector<26x128xf32>
    %433 = arith.subf %411, %432 : vector<26x128xf32>
    %434 = arith.mulf %430, %433 : vector<26x128xf32>
    %435 = vector.broadcast %424 : f32 to vector<26x128xf32>
    %436 = arith.subf %435, %434 : vector<26x128xf32>
    %437 = arith.mulf %428, %428 : vector<26x128xf32>
    %438 = arith.mulf %437, %417 : vector<26x128xf32>
    %439 = arith.addf %436, %438 : vector<26x128xf32>
    %c0_162 = arith.constant 0 : index
    %c5_163 = arith.constant 5 : index
    %440 = vector.load %arg4[%c0_162, %c5_163] : memref<28x8xf32, #tpu.memory_space<vmem>>, vector<26x1xf32>
    %441 = vector.broadcast %440 : vector<26x1xf32> to vector<26x128xf32>
    %442 = arith.mulf %439, %441 : vector<26x128xf32>
    %cst_164 = arith.constant dense<0x7F800000> : vector<128xf32>
    %443 = vector.multi_reduction <minimumf>, %442, %cst_164 [0] : vector<26x128xf32> to vector<128xf32>
    %cst_165 = arith.constant 0.000000e+00 : f32
    %444 = vector.broadcast %cst_165 : f32 to vector<128xf32>
    %445 = arith.maximumf %443, %444 : vector<128xf32>
    %c5_166 = arith.constant 5 : index
    %c0_167 = arith.constant 0 : index
    %446 = vector.load %arg5[%c5_166, %c0_167] : memref<8x128xf32, #tpu.memory_space<vmem>>, vector<1x128xf32>
    %447 = vector.shape_cast %446 : vector<1x128xf32> to vector<128xf32>
    %448 = vector.shape_cast %445 : vector<128xf32> to vector<1x128xf32>
    tpu.vector_store %arg5[%c5_166, %c0_167], %448 {strides = array<i32>} : memref<8x128xf32, #tpu.memory_space<vmem>>, vector<1x128xf32>,
    return
  }
  func.func @transform_0(%arg0: i32) -> i32 {
    %c0_i32 = arith.constant 0 : i32
    %c0_i32_0 = arith.constant 0 : i32
    return %c0_i32 : i32
  }
  func.func @transform_1(%arg0: i32) -> i32 {
    %c0_i32 = arith.constant 0 : i32
    %c0_i32_0 = arith.constant 0 : i32
    return %c0_i32 : i32
  }
  func.func @transform_2(%arg0: i32) -> (i32, i32, i32) {
    %c0_i32 = arith.constant 0 : i32
    %c0_i32_0 = arith.constant 0 : i32
    %c0_i32_1 = arith.constant 0 : i32
    return %c0_i32, %c0_i32_0, %arg0 : i32, i32, i32
  }
  func.func @transform_3(%arg0: i32) -> (i32, i32) {
    %c0_i32 = arith.constant 0 : i32
    %c0_i32_0 = arith.constant 0 : i32
    %c0_i32_1 = arith.constant 0 : i32
    return %c0_i32, %c0_i32_0 : i32, i32
  }
  func.func @transform_4(%arg0: i32) -> (i32, i32) {
    %c0_i32 = arith.constant 0 : i32
    %c0_i32_0 = arith.constant 0 : i32
    return %c0_i32, %arg0 : i32, i32
  }
}

</mosaic_0001>

<llo_original>
// kernel: tpu_custom_call.1
$region0: #{tpu_custom_call.1}
  #allocation0 [shape = 'u32[]', space=smem, size = 0x4, offset = 0x4, fixed_abs, tag = 'smem constant byte address 0x4 - core index']
  #allocation1 [shape = 'u32[144,128]{1,0:T(1,128)}', space=vmem, size = 0x12000, scoped, tag = 'internal scratch']
  %s0 = inlined_call_operand.vmem [shape: f32[34], index: 0, kind: input, shape index: {}]
  %s1 = inlined_call_operand.vmem [shape: f32[16], index: 1, kind: input, shape index: {}]
  %s2 = inlined_call_operand.hbm [shape: f32[4,32,128], index: 2, kind: input, shape index: {}]
  %s3 = inlined_call_operand.vmem [shape: f32[28,8], index: 3, kind: input, shape index: {}]
  %s4 = inlined_call_operand.hbm [shape: f32[8,128], index: 4, kind: output, shape index: {}]
  %s5 = sld [smem:[#allocation0]]
  $region38: #{tpu_custom_call.1} parent=0
    _
  %s7 = ssub.s32 1, %s5
  %s8 = scalar_select 0, %s7, %s5
  $region1: #{tpu_custom_call.1} parent=0
    #allocation2 [shape = 'u8[512]{0}', space=smem, size = 0x200, scoped, tag = 'input window, operand 0, single buffered']
    #allocation3 [shape = 's32[1]{0}', space=sflag, size = 0x4, scoped, tag = 'scoped memory for tpu_custom_call.1']
    #allocation4 [shape = 's32[1]{0}', space=sflag, size = 0x4, scoped, tag = 'scoped memory for tpu_custom_call.1']
    #allocation5 [shape = 's32[1]{0}', space=sflag, size = 0x4, scoped, tag = 'scoped memory for tpu_custom_call.1']
    #allocation6 [shape = 'u8[512]{0}', space=smem, size = 0x200, scoped, tag = 'input window, operand 1, single buffered']
    #allocation7 [shape = 's32[1]{0}', space=sflag, size = 0x4, scoped, tag = 'scoped memory for tpu_custom_call.1']
    #allocation8 [shape = 'u8[65536]{0}', space=vmem, size = 0x10000, scoped, tag = 'input window, operand 2, single buffered']
    #allocation9 [shape = 'u8[4096]{0}', space=vmem, size = 0x1000, scoped, tag = 'output window, operand 0, single buffered']
    %9 = vsyncpa [#allocation5], 0
    %10 = vsyncpa [#allocation7], 0
    %11 = vsyncpa [#allocation3], 0
    %12 = vsyncpa [#allocation4], 0
    // Predicated region
    $region2: #{tpu_custom_call.1} parent=1 // pred_check
      _
    $region3: #{tpu_custom_call.1} parent=1 // pred_check_branch
      %14 = sbr.rel (0) target = $region5
    $region4: #{tpu_custom_call.1} parent=1 // pred_region
      %s16 = ssub.s32 16, 16
      %17 = vsyncadd [#allocation5], %s16
      %s19 = sshll.u32 %s0, 4
      %s20 = int_to_ptr.vmem [resolvable:$true] %s19
      %22 = dma.vmem_to_smem %s20, 16, [#allocation2], [#allocation5]
    $region5: #{tpu_custom_call.1} parent=1 // pred_fallthru
      _
    // Predicated region
    $region6: #{tpu_custom_call.1} parent=1 // pred_check
      _
    $region7: #{tpu_custom_call.1} parent=1 // pred_check_branch
      %24 = sbr.rel (0) target = $region9
    $region8: #{tpu_custom_call.1} parent=1 // pred_region
      %s26 = ssub.s32 16, 16
      %27 = vsyncadd [#allocation7], %s26
      %s29 = sshll.u32 %s1, 4
      %s30 = int_to_ptr.vmem [resolvable:$true] %s29
      %32 = dma.vmem_to_smem %s30, 16, [#allocation6], [#allocation7]
    $region9: #{tpu_custom_call.1} parent=1 // pred_fallthru
      _
    // Predicated region
    $region10: #{tpu_custom_call.1} parent=1 // pred_check
      _
    $region11: #{tpu_custom_call.1} parent=1 // pred_check_branch
      %34 = sbr.rel (0) target = $region13
    $region12: #{tpu_custom_call.1} parent=1 // pred_region
      %s36 = ssub.s32 2048, 2048
      %37 = vsyncadd [#allocation3], %s36
      %s38 = sshll.u32 [#allocation8], 4
      %s39 = int_to_ptr.vmem [resolvable:$true] %s38
      %44 = dma.hbm_to_vmem [thread:$0]  %s2, 2048, %s39, [#allocation3], 128, 128, 8
    $region13: #{tpu_custom_call.1} parent=1 // pred_fallthru
      _
    // Predicated region
    $region14: #{tpu_custom_call.1} parent=1 // pred_check
      _
    $region15: #{tpu_custom_call.1} parent=1 // pred_check_branch
      %46 = sbr.rel (0) target = $region17
    $region16: #{tpu_custom_call.1} parent=1 // pred_region
      _
    $region17: #{tpu_custom_call.1} parent=1 // pred_fallthru
      _
    // Predicated region
    $region18: #{tpu_custom_call.1} parent=1 // pred_check
      _
    $region19: #{tpu_custom_call.1} parent=1 // pred_check_branch
      %48 = sbr.rel (0) target = $region21
    $region20: #{tpu_custom_call.1} parent=1 // pred_region
      %49 = dma.done [#allocation5], 16
    $region21: #{tpu_custom_call.1} parent=1 // pred_fallthru
      _
    // Predicated region
    $region22: #{tpu_custom_call.1} parent=1 // pred_check
      _
    $region23: #{tpu_custom_call.1} parent=1 // pred_check_branch
      %51 = sbr.rel (0) target = $region25
    $region24: #{tpu_custom_call.1} parent=1 // pred_region
      %52 = dma.done [#allocation7], 16
    $region25: #{tpu_custom_call.1} parent=1 // pred_fallthru
      _
    // Predicated region
    $region26: #{tpu_custom_call.1} parent=1 // pred_check
      _
    $region27: #{tpu_custom_call.1} parent=1 // pred_check_branch
      %54 = sbr.rel (0) target = $region29
    $region28: #{tpu_custom_call.1} parent=1 // pred_region
      %55 = dma.done [#allocation3], 2048
    $region29: #{tpu_custom_call.1} parent=1 // pred_fallthru
      _
    %56 = sfence
    %s57 = sld [smem:[#allocation2]]
    %s58 = sld [smem:[#allocation2 + $0x1]]
    %s59 = sld [smem:[#allocation2 + $0x2]]
    %s60 = sld [smem:[#allocation2 + $0x3]]
    %s61 = sld [smem:[#allocation2 + $0x4]]
    %s62 = sld [smem:[#allocation2 + $0x1a]]
    %s63 = sld [smem:[#allocation2 + $0x1b]]
    %s64 = sld [smem:[#allocation2 + $0x1c]]
    %s65 = sld [smem:[#allocation2 + $0x1d]]
    %s66 = sld [smem:[#allocation2 + $0x1e]]
    %v67 = vld [vmem:[#allocation8] sm:$0xff]
    %v68 = vld [vmem:[#allocation8 + $0x8] sm:$0xff]
    %v69 = vld [vmem:[#allocation8 + $0x10] sm:$0xff]
    %v70 = vld [vmem:[#allocation8 + $0x18] sm:$0xf]
    %v71 = vmul.f32 %v67, %v67
    %v72 = vmul.f32 %v68, %v68
    %v73 = vmul.f32 %v69, %v69
    %v74 = vmul.f32 %v70, %v70
    %v75 = vstv %s57
    %v76 = vmul.f32 %v75, %v67
    %v77 = vmul.f32 %v75, %v68
    %v78 = vmul.f32 %v75, %v69
    %v79 = vmul.f32 %v75, %v70
    %v80 = vstv %s62
    %v81 = vmul.f32 %v80, %v67
    %v82 = vmul.f32 %v80, %v68
    %v83 = vmul.f32 %v80, %v69
    %v84 = vmul.f32 %v80, %v70
    %v85 = vld [vmem:[#allocation8 + $0x1] sm:$0xff]
    %v86 = vld [vmem:[#allocation8 + $0x9] sm:$0xff]
    %v87 = vld [vmem:[#allocation8 + $0x11] sm:$0xff]
    %v88 = vld [vmem:[#allocation8 + $0x19] sm:$0xf]
    %v89 = vmul.f32 %v85, %v85
    %v90 = vmul.f32 %v86, %v86
    %v91 = vmul.f32 %v87, %v87
    %v92 = vmul.f32 %v88, %v88
    %v93 = vadd.f32 %v71, %v89
    %v94 = vadd.f32 %v72, %v90
    %v95 = vadd.f32 %v73, %v91
    %v96 = vadd.f32 %v74, %v92
    %v97 = vadd.f32 %v67, %v85
    %v98 = vadd.f32 %v68, %v86
    %v99 = vadd.f32 %v69, %v87
    %v100 = vadd.f32 %v70, %v88
    %v101 = vstv %s58
    %v102 = vmul.f32 %v101, %v85
    %v103 = vmul.f32 %v101, %v86
    %v104 = vmul.f32 %v101, %v87
    %v105 = vmul.f32 %v101, %v88
    %v106 = vadd.f32 %v76, %v102
    %v107 = vadd.f32 %v77, %v103
    %v108 = vadd.f32 %v78, %v104
    %v109 = vadd.f32 %v79, %v105
    %v110 = vstv %s63
    %v111 = vmul.f32 %v110, %v85
    %v112 = vmul.f32 %v110, %v86
    %v113 = vmul.f32 %v110, %v87
    %v114 = vmul.f32 %v110, %v88
    %v115 = vadd.f32 %v81, %v111
    %v116 = vadd.f32 %v82, %v112
    %v117 = vadd.f32 %v83, %v113
    %v118 = vadd.f32 %v84, %v114
    %v119 = vld [vmem:[#allocation8 + $0x2] sm:$0xff]
    %v120 = vld [vmem:[#allocation8 + $0xa] sm:$0xff]
    %v121 = vld [vmem:[#allocation8 + $0x12] sm:$0xff]
    %v122 = vld [vmem:[#allocation8 + $0x1a] sm:$0xf]
    %v123 = vmul.f32 %v119, %v119
    %v124 = vmul.f32 %v120, %v120
    %v125 = vmul.f32 %v121, %v121
    %v126 = vmul.f32 %v122, %v122
    %v127 = vadd.f32 %v93, %v123
    %v128 = vadd.f32 %v94, %v124
    %v129 = vadd.f32 %v95, %v125
    %v130 = vadd.f32 %v96, %v126
    %v131 = vadd.f32 %v97, %v119
    %v132 = vadd.f32 %v98, %v120
    %v133 = vadd.f32 %v99, %v121
    %v134 = vadd.f32 %v100, %v122
    %v135 = vstv %s59
    %v136 = vmul.f32 %v135, %v119
    %v137 = vmul.f32 %v135, %v120
    %v138 = vmul.f32 %v135, %v121
    %v139 = vmul.f32 %v135, %v122
    %v140 = vadd.f32 %v106, %v136
    %v141 = vadd.f32 %v107, %v137
    %v142 = vadd.f32 %v108, %v138
    %v143 = vadd.f32 %v109, %v139
    %v144 = vstv %s64
    %v145 = vmul.f32 %v144, %v119
    %v146 = vmul.f32 %v144, %v120
    %v147 = vmul.f32 %v144, %v121
    %v148 = vmul.f32 %v144, %v122
    %v149 = vadd.f32 %v115, %v145
    %v150 = vadd.f32 %v116, %v146
    %v151 = vadd.f32 %v117, %v147
    %v152 = vadd.f32 %v118, %v148
    %v153 = vld [vmem:[#allocation8 + $0x3] sm:$0xff]
    %v154 = vld [vmem:[#allocation8 + $0xb] sm:$0xff]
    %v155 = vld [vmem:[#allocation8 + $0x13] sm:$0xff]
    %v156 = vld [vmem:[#allocation8 + $0x1b] sm:$0xf]
    %v157 = vmul.f32 %v153, %v153
    %v158 = vmul.f32 %v154, %v154
    %v159 = vmul.f32 %v155, %v155
    %v160 = vmul.f32 %v156, %v156
    %v161 = vadd.f32 %v127, %v157
    %v162 = vadd.f32 %v128, %v158
    %v163 = vadd.f32 %v129, %v159
    %v164 = vadd.f32 %v130, %v160
    %v165 = vadd.f32 %v131, %v153
    %v166 = vadd.f32 %v132, %v154
    %v167 = vadd.f32 %v133, %v155
    %v168 = vadd.f32 %v134, %v156
    %v169 = vstv %s60
    %v170 = vmul.f32 %v169, %v153
    %v171 = vmul.f32 %v169, %v154
    %v172 = vmul.f32 %v169, %v155
    %v173 = vmul.f32 %v169, %v156
    %v174 = vadd.f32 %v140, %v170
    %v175 = vadd.f32 %v141, %v171
    %v176 = vadd.f32 %v142, %v172
    %v177 = vadd.f32 %v143, %v173
    %v178 = vstv %s65
    %v179 = vmul.f32 %v178, %v153
    %v180 = vmul.f32 %v178, %v154
    %v181 = vmul.f32 %v178, %v155
    %v182 = vmul.f32 %v178, %v156
    %v183 = vadd.f32 %v149, %v179
    %v184 = vadd.f32 %v150, %v180
    %v185 = vadd.f32 %v151, %v181
    %v186 = vadd.f32 %v152, %v182
    %v187 = vld [vmem:[#allocation8 + $0x4] sm:$0xff]
    %v188 = vld [vmem:[#allocation8 + $0xc] sm:$0xff]
    %v189 = vld [vmem:[#allocation8 + $0x14] sm:$0xff]
    %v190 = vld [vmem:[#allocation8 + $0x1c] sm:$0xf]
    %v191 = vmul.f32 %v187, %v187
    %v192 = vmul.f32 %v188, %v188
    %v193 = vmul.f32 %v189, %v189
    %v194 = vmul.f32 %v190, %v190
    %v195 = vadd.f32 %v161, %v191
    %v196 = vadd.f32 %v162, %v192
    %v197 = vadd.f32 %v163, %v193
    %v198 = vadd.f32 %v164, %v194
    %v199 = vadd.f32 %v165, %v187
    %v200 = vadd.f32 %v166, %v188
    %v201 = vadd.f32 %v167, %v189
    %v202 = vadd.f32 %v168, %v190
    %v203 = vstv %s61
    %v204 = vmul.f32 %v203, %v187
    %v205 = vmul.f32 %v203, %v188
    %v206 = vmul.f32 %v203, %v189
    %v207 = vmul.f32 %v203, %v190
    %v208 = vadd.f32 %v174, %v204
    %v209 = vadd.f32 %v175, %v205
    %v210 = vadd.f32 %v176, %v206
    %v211 = vadd.f32 %v177, %v207
    %v212 = vstv %s66
    %v213 = vmul.f32 %v212, %v187
    %v214 = vmul.f32 %v212, %v188
    %v215 = vmul.f32 %v212, %v189
    %v216 = vmul.f32 %v212, %v190
    %v217 = vadd.f32 %v183, %v213
    %v218 = vadd.f32 %v184, %v214
    %v219 = vadd.f32 %v185, %v215
    %v220 = vadd.f32 %v186, %v216
    %v221 = vmul.f32 %v199, 0.2
    %v222 = vmul.f32 %v200, 0.2
    %v223 = vmul.f32 %v201, 0.2
    %v224 = vmul.f32 %v202, 0.2
    %v225 = vmul.f32 %v221, 5.0
    %v226 = vmul.f32 %v222, 5.0
    %v227 = vmul.f32 %v223, 5.0
    %v228 = vmul.f32 %v224, 5.0
    %v229 = vmul.f32 %v225, %v221
    %v230 = vmul.f32 %v226, %v222
    %v231 = vmul.f32 %v227, %v223
    %v232 = vmul.f32 %v228, %v224
    %v233 = vsub.f32 %v195, %v229
    %v234 = vsub.f32 %v196, %v230
    %v235 = vsub.f32 %v197, %v231
    %v236 = vsub.f32 %v198, %v232
    %s237 = sld [smem:[#allocation6 + $0x1]]
    %v238 = vmul.f32 %v208, 2.0
    %v239 = vmul.f32 %v209, 2.0
    %v240 = vmul.f32 %v210, 2.0
    %v241 = vmul.f32 %v211, 2.0
    %v242 = vstv %s237
    %v243 = vsub.f32 %v242, %v238
    %v244 = vsub.f32 %v242, %v239
    %v245 = vsub.f32 %v242, %v240
    %v246 = vsub.f32 %v242, %v241
    %v247 = vadd.f32 %v243, %v195
    %v248 = vadd.f32 %v244, %v196
    %v249 = vadd.f32 %v245, %v197
    %v250 = vadd.f32 %v246, %v198
    %v251 = vld [vmem:[%s3] sm:$0xff]
    %v252 = vld [vmem:[%s3 + $0x8] sm:$0xff]
    %v253 = vld [vmem:[%s3 + $0x10] sm:$0xff]
    %v254 = vld [vmem:[%s3 + $0x18] sm:$0xf]
    %256 = vset.pattern.permute.xlu0 0
    %257 = vperm.xlu0 %256, %v251
    %v258 = vpop.permute.xlu0 %257
    %261 = vset.pattern.permute.xlu0 0
    %262 = vperm.xlu0 %261, %v252
    %v263 = vpop.permute.xlu0 %262
    %266 = vset.pattern.permute.xlu0 0
    %267 = vperm.xlu0 %266, %v253
    %v268 = vpop.permute.xlu0 %267
    %271 = vset.pattern.permute.xlu0 0
    %272 = vperm.xlu0 %271, %v254
    %v273 = vpop.permute.xlu0 %272
    %v275 = vmul.f32 %v247, %v258
    %v276 = vmul.f32 %v248, %v263
    %v277 = vmul.f32 %v249, %v268
    %v278 = vmul.f32 %v250, %v273
    %vm279 = vcmask 1043456
    %v280 = vsel %vm279, %v278, inf
    %v281 = vmin.f32 %v275, %v276
    %v282 = vmin.f32 %v277, %v280
    %v283 = vmin.f32 %v281, %v282
    %v284 = vrot.slane %v283, 4
    %v285 = vmin.f32 %v283, %v284
    %v286 = vrot.slane %v285, 2
    %v287 = vmin.f32 %v285, %v286
    %v288 = vrot.slane %v287, 1
    %v289 = vmin.f32 %v287, %v288
    %v290 = vmax.f32 %v289, 0.0
    %291 = vst [vmem:[#allocation9] sm:$0x1] %v290
    %s292 = sld [smem:[#allocation6 + $0xc]]
    %s293 = sld [smem:[#allocation6 + $0xd]]
    %v294 = vmul.f32 %v217, 2.0
    %v295 = vmul.f32 %v218, 2.0
    %v296 = vmul.f32 %v219, 2.0
    %v297 = vmul.f32 %v220, 2.0
    %v298 = vstv %s293
    %v299 = vsub.f32 %v298, %v294
    %v300 = vsub.f32 %v298, %v295
    %v301 = vsub.f32 %v298, %v296
    %v302 = vsub.f32 %v298, %v297
    %v303 = vmul.f32 %v221, 2.0
    %v304 = vmul.f32 %v222, 2.0
    %v305 = vmul.f32 %v223, 2.0
    %v306 = vmul.f32 %v224, 2.0
    %v307 = vstv %s292
    %v308 = vmul.f32 %v303, %v307
    %v309 = vmul.f32 %v304, %v307
    %v310 = vmul.f32 %v305, %v307
    %v311 = vmul.f32 %v306, %v307
    %v312 = vadd.f32 %v299, %v308
    %v313 = vadd.f32 %v300, %v309
    %v314 = vadd.f32 %v301, %v310
    %v315 = vadd.f32 %v302, %v311
    %v316 = vadd.f32 %v312, %v233
    %v317 = vadd.f32 %v313, %v234
    %v318 = vadd.f32 %v314, %v235
    %v319 = vadd.f32 %v315, %v236
    %v320 = vld [vmem:[%s3] sm:$0xff]
    %v321 = vld [vmem:[%s3 + $0x8] sm:$0xff]
    %v322 = vld [vmem:[%s3 + $0x10] sm:$0xff]
    %v323 = vld [vmem:[%s3 + $0x18] sm:$0xf]
    %325 = vset.pattern.permute.xlu0 6
    %326 = vperm.xlu0 %325, %v320
    %v327 = vpop.permute.xlu0 %326
    %330 = vset.pattern.permute.xlu0 6
    %331 = vperm.xlu0 %330, %v321
    %v332 = vpop.permute.xlu0 %331
    %335 = vset.pattern.permute.xlu0 6
    %336 = vperm.xlu0 %335, %v322
    %v337 = vpop.permute.xlu0 %336
    %340 = vset.pattern.permute.xlu0 6
    %341 = vperm.xlu0 %340, %v323
    %v342 = vpop.permute.xlu0 %341
    %v344 = vmul.f32 %v316, %v327
    %v345 = vmul.f32 %v317, %v332
    %v346 = vmul.f32 %v318, %v337
    %v347 = vmul.f32 %v319, %v342
    %v348 = vsel %vm279, %v347, inf
    %v349 = vmin.f32 %v344, %v345
    %v350 = vmin.f32 %v346, %v348
    %v351 = vmin.f32 %v349, %v350
    %v352 = vrot.slane %v351, 4
    %v353 = vmin.f32 %v351, %v352
    %v354 = vrot.slane %v353, 2
    %v355 = vmin.f32 %v353, %v354
    %v356 = vrot.slane %v355, 1
    %v357 = vmin.f32 %v355, %v356
    %v358 = vmax.f32 %v357, 0.0
    %359 = vst [vmem:[#allocation9 + $0x6] sm:$0x1] %v358
    %s360 = sld [smem:[#allocation2 + $0x5]]
    %s361 = sld [smem:[#allocation2 + $0x6]]
    %s362 = sld [smem:[#allocation2 + $0x7]]
    %s363 = sld [smem:[#allocation2 + $0x8]]
    %s364 = sld [smem:[#allocation2 + $0x9]]
    %s365 = scalar_lea.vmem [#allocation8], 32
    %v366 = vld [vmem:[%s365] sm:$0xff]
    %v367 = vld [vmem:[%s365 + $0x8] sm:$0xff]
    %v368 = vld [vmem:[%s365 + $0x10] sm:$0xff]
    %v369 = vmul.f32 %v366, %v366
    %v370 = vmul.f32 %v367, %v367
    %v371 = vmul.f32 %v368, %v368
    %v372 = vstv %s360
    %v373 = vmul.f32 %v372, %v366
    %v374 = vmul.f32 %v372, %v367
    %v375 = vmul.f32 %v372, %v368
    %v376 = vld [vmem:[%s365 + $0x2] sm:$0xff]
    %v377 = vld [vmem:[%s365 + $0xa] sm:$0xff]
    %v378 = vld [vmem:[%s365 + $0x12] sm:$0xff]
    %v379 = vmul.f32 %v376, %v376
    %v380 = vmul.f32 %v377, %v377
    %v381 = vmul.f32 %v378, %v378
    %v382 = vadd.f32 %v369, %v379
    %v383 = vadd.f32 %v370, %v380
    %v384 = vadd.f32 %v371, %v381
    %v385 = vadd.f32 %v366, %v376
    %v386 = vadd.f32 %v367, %v377
    %v387 = vadd.f32 %v368, %v378
    %v388 = vstv %s361
    %v389 = vmul.f32 %v388, %v376
    %v390 = vmul.f32 %v388, %v377
    %v391 = vmul.f32 %v388, %v378
    %v392 = vadd.f32 %v373, %v389
    %v393 = vadd.f32 %v374, %v390
    %v394 = vadd.f32 %v375, %v391
    %v395 = vld [vmem:[%s365 + $0x4] sm:$0xff]
    %v396 = vld [vmem:[%s365 + $0xc] sm:$0xff]
    %v397 = vld [vmem:[%s365 + $0x14] sm:$0xff]
    %v398 = vmul.f32 %v395, %v395
    %v399 = vmul.f32 %v396, %v396
    %v400 = vmul.f32 %v397, %v397
    %v401 = vadd.f32 %v382, %v398
    %v402 = vadd.f32 %v383, %v399
    %v403 = vadd.f32 %v384, %v400
    %v404 = vadd.f32 %v385, %v395
    %v405 = vadd.f32 %v386, %v396
    %v406 = vadd.f32 %v387, %v397
    %v407 = vstv %s362
    %v408 = vmul.f32 %v407, %v395
    %v409 = vmul.f32 %v407, %v396
    %v410 = vmul.f32 %v407, %v397
    %v411 = vadd.f32 %v392, %v408
    %v412 = vadd.f32 %v393, %v409
    %v413 = vadd.f32 %v394, %v410
    %v414 = vld [vmem:[%s365 + $0x6] sm:$0xff]
    %v415 = vld [vmem:[%s365 + $0xe] sm:$0xff]
    %v416 = vld [vmem:[%s365 + $0x16] sm:$0xff]
    %v417 = vmul.f32 %v414, %v414
    %v418 = vmul.f32 %v415, %v415
    %v419 = vmul.f32 %v416, %v416
    %v420 = vadd.f32 %v401, %v417
    %v421 = vadd.f32 %v402, %v418
    %v422 = vadd.f32 %v403, %v419
    %v423 = vadd.f32 %v404, %v414
    %v424 = vadd.f32 %v405, %v415
    %v425 = vadd.f32 %v406, %v416
    %v426 = vstv %s363
    %v427 = vmul.f32 %v426, %v414
    %v428 = vmul.f32 %v426, %v415
    %v429 = vmul.f32 %v426, %v416
    %v430 = vadd.f32 %v411, %v427
    %v431 = vadd.f32 %v412, %v428
    %v432 = vadd.f32 %v413, %v429
    %v433 = vld [vmem:[%s365 + $0x18] sm:$0xff]
    %v434 = vmul.f32 %v433, %v433
    %v435 = vadd.f32 %v420, %v370
    %v436 = vadd.f32 %v421, %v371
    %v437 = vadd.f32 %v422, %v434
    %v438 = vadd.f32 %v423, %v367
    %v439 = vadd.f32 %v424, %v368
    %v440 = vadd.f32 %v425, %v433
    %v441 = vstv %s364
    %v442 = vmul.f32 %v441, %v367
    %v443 = vmul.f32 %v441, %v368
    %v444 = vmul.f32 %v441, %v433
    %v445 = vadd.f32 %v430, %v442
    %v446 = vadd.f32 %v431, %v443
    %v447 = vadd.f32 %v432, %v444
    %v448 = vmul.f32 %v438, 0.2
    %v449 = vmul.f32 %v439, 0.2
    %v450 = vmul.f32 %v440, 0.2
    %v451 = vmul.f32 %v448, 5.0
    %v452 = vmul.f32 %v449, 5.0
    %v453 = vmul.f32 %v450, 5.0
    %v454 = vmul.f32 %v451, %v448
    %v455 = vmul.f32 %v452, %v449
    %v456 = vmul.f32 %v453, %v450
    %v457 = vsub.f32 %v435, %v454
    %v458 = vsub.f32 %v436, %v455
    %v459 = vsub.f32 %v437, %v456
    %s460 = sld [smem:[#allocation6 + $0x2]]
    %s461 = sld [smem:[#allocation6 + $0x3]]
    %v462 = vmul.f32 %v445, 2.0
    %v463 = vmul.f32 %v446, 2.0
    %v464 = vmul.f32 %v447, 2.0
    %v465 = vstv %s461
    %v466 = vsub.f32 %v465, %v462
    %v467 = vsub.f32 %v465, %v463
    %v468 = vsub.f32 %v465, %v464
    %v469 = vmul.f32 %v448, 2.0
    %v470 = vmul.f32 %v449, 2.0
    %v471 = vmul.f32 %v450, 2.0
    %v472 = vstv %s460
    %v473 = vmul.f32 %v469, %v472
    %v474 = vmul.f32 %v470, %v472
    %v475 = vmul.f32 %v471, %v472
    %v476 = vadd.f32 %v466, %v473
    %v477 = vadd.f32 %v467, %v474
    %v478 = vadd.f32 %v468, %v475
    %v479 = vadd.f32 %v476, %v457
    %v480 = vadd.f32 %v477, %v458
    %v481 = vadd.f32 %v478, %v459
    %v482 = vld [vmem:[%s3] sm:$0xff]
    %v483 = vld [vmem:[%s3 + $0x8] sm:$0xff]
    %v484 = vld [vmem:[%s3 + $0x10] sm:$0xff]
    %486 = vset.pattern.permute.xlu0 1
    %487 = vperm.xlu0 %486, %v482
    %v488 = vpop.permute.xlu0 %487
    %491 = vset.pattern.permute.xlu0 1
    %492 = vperm.xlu0 %491, %v483
    %v493 = vpop.permute.xlu0 %492
    %496 = vset.pattern.permute.xlu0 1
    %497 = vperm.xlu0 %496, %v484
    %v498 = vpop.permute.xlu0 %497
    %v500 = vmul.f32 %v479, %v488
    %v501 = vmul.f32 %v480, %v493
    %v502 = vmul.f32 %v481, %v498
    %v503 = vmin.f32 %v500, %v501
    %v504 = vmin.f32 %v503, %v502
    %v505 = vrot.slane %v504, 4
    %v506 = vmin.f32 %v504, %v505
    %v507 = vrot.slane %v506, 2
    %v508 = vmin.f32 %v506, %v507
    %v509 = vrot.slane %v508, 1
    %v510 = vmin.f32 %v508, %v509
    %v511 = vmax.f32 %v510, 0.0
    %512 = vst [vmem:[#allocation9 + $0x1] sm:$0x1] %v511
    %s513 = sld [smem:[#allocation2 + $0xa]]
    %s514 = sld [smem:[#allocation2 + $0xb]]
    %s515 = sld [smem:[#allocation2 + $0xc]]
    %s516 = sld [smem:[#allocation2 + $0x1f]]
    %s517 = sld [smem:[#allocation2 + $0x20]]
    %s518 = sld [smem:[#allocation2 + $0x21]]
    %s519 = scalar_lea.vmem [#allocation8], 64
    %v520 = vld [vmem:[%s519] sm:$0xff]
    %v521 = vld [vmem:[%s519 + $0x8] sm:$0xff]
    %v522 = vld [vmem:[%s519 + $0x10] sm:$0xff]
    %v523 = vld [vmem:[%s519 + $0x18] sm:$0x3]
    %v524 = vmul.f32 %v520, %v520
    %v525 = vmul.f32 %v521, %v521
    %v526 = vmul.f32 %v522, %v522
    %v527 = vmul.f32 %v523, %v523
    %v528 = vstv %s513
    %v529 = vmul.f32 %v528, %v520
    %v530 = vmul.f32 %v528, %v521
    %v531 = vmul.f32 %v528, %v522
    %v532 = vmul.f32 %v528, %v523
    %v533 = vstv %s516
    %v534 = vmul.f32 %v533, %v520
    %v535 = vmul.f32 %v533, %v521
    %v536 = vmul.f32 %v533, %v522
    %v537 = vmul.f32 %v533, %v523
    %v538 = vld [vmem:[%s519 + $0x3] sm:$0xff]
    %v539 = vld [vmem:[%s519 + $0xb] sm:$0xff]
    %v540 = vld [vmem:[%s519 + $0x13] sm:$0xff]
    %v541 = vld [vmem:[%s519 + $0x1b] sm:$0x3]
    %v542 = vmul.f32 %v538, %v538
    %v543 = vmul.f32 %v539, %v539
    %v544 = vmul.f32 %v540, %v540
    %v545 = vmul.f32 %v541, %v541
    %v546 = vadd.f32 %v524, %v542
    %v547 = vadd.f32 %v525, %v543
    %v548 = vadd.f32 %v526, %v544
    %v549 = vadd.f32 %v527, %v545
    %v550 = vadd.f32 %v520, %v538
    %v551 = vadd.f32 %v521, %v539
    %v552 = vadd.f32 %v522, %v540
    %v553 = vadd.f32 %v523, %v541
    %v554 = vstv %s514
    %v555 = vmul.f32 %v554, %v538
    %v556 = vmul.f32 %v554, %v539
    %v557 = vmul.f32 %v554, %v540
    %v558 = vmul.f32 %v554, %v541
    %v559 = vadd.f32 %v529, %v555
    %v560 = vadd.f32 %v530, %v556
    %v561 = vadd.f32 %v531, %v557
    %v562 = vadd.f32 %v532, %v558
    %v563 = vstv %s517
    %v564 = vmul.f32 %v563, %v538
    %v565 = vmul.f32 %v563, %v539
    %v566 = vmul.f32 %v563, %v540
    %v567 = vmul.f32 %v563, %v541
    %v568 = vadd.f32 %v534, %v564
    %v569 = vadd.f32 %v535, %v565
    %v570 = vadd.f32 %v536, %v566
    %v571 = vadd.f32 %v537, %v567
    %v572 = vld [vmem:[%s519 + $0x6] sm:$0xff]
    %v573 = vld [vmem:[%s519 + $0xe] sm:$0xff]
    %v574 = vld [vmem:[%s519 + $0x16] sm:$0xff]
    %v575 = vld [vmem:[%s519 + $0x1e] sm:$0x3]
    %v576 = vmul.f32 %v572, %v572
    %v577 = vmul.f32 %v573, %v573
    %v578 = vmul.f32 %v574, %v574
    %v579 = vmul.f32 %v575, %v575
    %v580 = vadd.f32 %v546, %v576
    %v581 = vadd.f32 %v547, %v577
    %v582 = vadd.f32 %v548, %v578
    %v583 = vadd.f32 %v549, %v579
    %v584 = vadd.f32 %v550, %v572
    %v585 = vadd.f32 %v551, %v573
    %v586 = vadd.f32 %v552, %v574
    %v587 = vadd.f32 %v553, %v575
    %v588 = vstv %s515
    %v589 = vmul.f32 %v588, %v572
    %v590 = vmul.f32 %v588, %v573
    %v591 = vmul.f32 %v588, %v574
    %v592 = vmul.f32 %v588, %v575
    %v593 = vadd.f32 %v559, %v589
    %v594 = vadd.f32 %v560, %v590
    %v595 = vadd.f32 %v561, %v591
    %v596 = vadd.f32 %v562, %v592
    %v597 = vstv %s518
    %v598 = vmul.f32 %v597, %v572
    %v599 = vmul.f32 %v597, %v573
    %v600 = vmul.f32 %v597, %v574
    %v601 = vmul.f32 %v597, %v575
    %v602 = vadd.f32 %v568, %v598
    %v603 = vadd.f32 %v569, %v599
    %v604 = vadd.f32 %v570, %v600
    %v605 = vadd.f32 %v571, %v601
    %v606 = vmul.f32 %v584, 0.33333334
    %v607 = vmul.f32 %v585, 0.33333334
    %v608 = vmul.f32 %v586, 0.33333334
    %v609 = vmul.f32 %v587, 0.33333334
    %v610 = vmul.f32 %v606, 3.0
    %v611 = vmul.f32 %v607, 3.0
    %v612 = vmul.f32 %v608, 3.0
    %v613 = vmul.f32 %v609, 3.0
    %v614 = vmul.f32 %v610, %v606
    %v615 = vmul.f32 %v611, %v607
    %v616 = vmul.f32 %v612, %v608
    %v617 = vmul.f32 %v613, %v609
    %v618 = vsub.f32 %v580, %v614
    %v619 = vsub.f32 %v581, %v615
    %v620 = vsub.f32 %v582, %v616
    %v621 = vsub.f32 %v583, %v617
    %v622 = vmul.f32 %v618, 0.5
    %v623 = vmul.f32 %v619, 0.5
    %v624 = vmul.f32 %v620, 0.5
    %v625 = vmul.f32 %v621, 0.5
    %v626 = vmax.f32 %v622, 0.0
    %v627 = vmax.f32 %v623, 0.0
    %v628 = vmax.f32 %v624, 0.0
    %v629 = vmax.f32 %v625, 0.0
    %v630 = vrsqrt.pop %v626
    %v631 = vmul.f32 %v626, %v630
    %vm632 = vcmp.eq.f32.partialorder %v626, inf
    %v633 = vsel %vm632, %v626, %v631
    %vm634 = vcmp.eq.f32.partialorder %v626, 0.0
    %v635 = vand.u32 %v626, 2147483648
    %v636 = vsel %vm634, %v635, %v633
    %v637 = vrsqrt.pop %v627
    %v638 = vmul.f32 %v627, %v637
    %vm639 = vcmp.eq.f32.partialorder %v627, inf
    %v640 = vsel %vm639, %v627, %v638
    %vm641 = vcmp.eq.f32.partialorder %v627, 0.0
    %v642 = vand.u32 %v627, 2147483648
    %v643 = vsel %vm641, %v642, %v640
    %v644 = vrsqrt.pop %v628
    %v645 = vmul.f32 %v628, %v644
    %vm646 = vcmp.eq.f32.partialorder %v628, inf
    %v647 = vsel %vm646, %v628, %v645
    %vm648 = vcmp.eq.f32.partialorder %v628, 0.0
    %v649 = vand.u32 %v628, 2147483648
    %v650 = vsel %vm648, %v649, %v647
    %v651 = vrsqrt.pop %v629
    %v652 = vmul.f32 %v629, %v651
    %vm653 = vcmp.eq.f32.partialorder %v629, inf
    %v654 = vsel %vm653, %v629, %v652
    %vm655 = vcmp.eq.f32.partialorder %v629, 0.0
    %v656 = vand.u32 %v629, 2147483648
    %v657 = vsel %vm655, %v656, %v654
    %s658 = sld [smem:[#allocation6 + $0x4]]
    %s659 = sld [smem:[#allocation6 + $0x5]]
    %v660 = vadd.f32 %v636, 1e-05
    %v661 = vadd.f32 %v643, 1e-05
    %v662 = vadd.f32 %v650, 1e-05
    %v663 = vadd.f32 %v657, 1e-05
    %v664 = vrcp.pop %v660
    %v665 = vmul.f32 1.0, %v664
    %v666 = vrcp.pop %v661
    %v667 = vmul.f32 1.0, %v666
    %v668 = vrcp.pop %v662
    %v669 = vmul.f32 1.0, %v668
    %v670 = vrcp.pop %v663
    %v671 = vmul.f32 1.0, %v670
    %v672 = vmul.f32 %v665, 2.0
    %v673 = vmul.f32 %v667, 2.0
    %v674 = vmul.f32 %v669, 2.0
    %v675 = vmul.f32 %v671, 2.0
    %v676 = vstv %s658
    %v677 = vmul.f32 %v606, %v676
    %v678 = vmul.f32 %v607, %v676
    %v679 = vmul.f32 %v608, %v676
    %v680 = vmul.f32 %v609, %v676
    %v681 = vsub.f32 %v593, %v677
    %v682 = vsub.f32 %v594, %v678
    %v683 = vsub.f32 %v595, %v679
    %v684 = vsub.f32 %v596, %v680
    %v685 = vmul.f32 %v672, %v681
    %v686 = vmul.f32 %v673, %v682
    %v687 = vmul.f32 %v674, %v683
    %v688 = vmul.f32 %v675, %v684
    %v689 = vstv %s659
    %v690 = vsub.f32 %v689, %v685
    %v691 = vsub.f32 %v689, %v686
    %v692 = vsub.f32 %v689, %v687
    %v693 = vsub.f32 %v689, %v688
    %v694 = vmul.f32 %v665, %v665
    %v695 = vmul.f32 %v667, %v667
    %v696 = vmul.f32 %v669, %v669
    %v697 = vmul.f32 %v671, %v671
    %v698 = vmul.f32 %v694, %v618
    %v699 = vmul.f32 %v695, %v619
    %v700 = vmul.f32 %v696, %v620
    %v701 = vmul.f32 %v697, %v621
    %v702 = vadd.f32 %v690, %v698
    %v703 = vadd.f32 %v691, %v699
    %v704 = vadd.f32 %v692, %v700
    %v705 = vadd.f32 %v693, %v701
    %v706 = vld [vmem:[%s3] sm:$0xff]
    %v707 = vld [vmem:[%s3 + $0x8] sm:$0xff]
    %v708 = vld [vmem:[%s3 + $0x10] sm:$0xff]
    %v709 = vld [vmem:[%s3 + $0x18] sm:$0x3]
    %711 = vset.pattern.permute.xlu0 2
    %712 = vperm.xlu0 %711, %v706
    %v713 = vpop.permute.xlu0 %712
    %716 = vset.pattern.permute.xlu0 2
    %717 = vperm.xlu0 %716, %v707
    %v718 = vpop.permute.xlu0 %717
    %721 = vset.pattern.permute.xlu0 2
    %722 = vperm.xlu0 %721, %v708
    %v723 = vpop.permute.xlu0 %722
    %726 = vset.pattern.permute.xlu0 2
    %727 = vperm.xlu0 %726, %v709
    %v728 = vpop.permute.xlu0 %727
    %v730 = vmul.f32 %v702, %v713
    %v731 = vmul.f32 %v703, %v718
    %v732 = vmul.f32 %v704, %v723
    %v733 = vmul.f32 %v705, %v728
    %vm734 = vcmask 1041408
    %v735 = vsel %vm734, %v733, inf
    %v736 = vmin.f32 %v730, %v731
    %v737 = vmin.f32 %v732, %v735
    %v738 = vmin.f32 %v736, %v737
    %v739 = vrot.slane %v738, 4
    %v740 = vmin.f32 %v738, %v739
    %v741 = vrot.slane %v740, 2
    %v742 = vmin.f32 %v740, %v741
    %v743 = vrot.slane %v742, 1
    %v744 = vmin.f32 %v742, %v743
    %v745 = vmax.f32 %v744, 0.0
    %746 = vst [vmem:[#allocation9 + $0x2] sm:$0x1] %v745
    %s747 = sld [smem:[#allocation6 + $0xe]]
    %s748 = sld [smem:[#allocation6 + $0xf]]
    %v749 = vstv %s747
    %v750 = vmul.f32 %v606, %v749
    %v751 = vmul.f32 %v607, %v749
    %v752 = vmul.f32 %v608, %v749
    %v753 = vmul.f32 %v609, %v749
    %v754 = vsub.f32 %v602, %v750
    %v755 = vsub.f32 %v603, %v751
    %v756 = vsub.f32 %v604, %v752
    %v757 = vsub.f32 %v605, %v753
    %v758 = vmul.f32 %v672, %v754
    %v759 = vmul.f32 %v673, %v755
    %v760 = vmul.f32 %v674, %v756
    %v761 = vmul.f32 %v675, %v757
    %v762 = vstv %s748
    %v763 = vsub.f32 %v762, %v758
    %v764 = vsub.f32 %v762, %v759
    %v765 = vsub.f32 %v762, %v760
    %v766 = vsub.f32 %v762, %v761
    %v767 = vadd.f32 %v763, %v698
    %v768 = vadd.f32 %v764, %v699
    %v769 = vadd.f32 %v765, %v700
    %v770 = vadd.f32 %v766, %v701
    %v771 = vld [vmem:[%s3] sm:$0xff]
    %v772 = vld [vmem:[%s3 + $0x8] sm:$0xff]
    %v773 = vld [vmem:[%s3 + $0x10] sm:$0xff]
    %v774 = vld [vmem:[%s3 + $0x18] sm:$0x3]
    %776 = vset.pattern.permute.xlu0 7
    %777 = vperm.xlu0 %776, %v771
    %v778 = vpop.permute.xlu0 %777
    %781 = vset.pattern.permute.xlu0 7
    %782 = vperm.xlu0 %781, %v772
    %v783 = vpop.permute.xlu0 %782
    %786 = vset.pattern.permute.xlu0 7
    %787 = vperm.xlu0 %786, %v773
    %v788 = vpop.permute.xlu0 %787
    %791 = vset.pattern.permute.xlu0 7
    %792 = vperm.xlu0 %791, %v774
    %v793 = vpop.permute.xlu0 %792
    %v795 = vmul.f32 %v767, %v778
    %v796 = vmul.f32 %v768, %v783
    %v797 = vmul.f32 %v769, %v788
    %v798 = vmul.f32 %v770, %v793
    %v799 = vsel %vm734, %v798, inf
    %v800 = vmin.f32 %v795, %v796
    %v801 = vmin.f32 %v797, %v799
    %v802 = vmin.f32 %v800, %v801
    %v803 = vrot.slane %v802, 4
    %v804 = vmin.f32 %v802, %v803
    %v805 = vrot.slane %v804, 2
    %v806 = vmin.f32 %v804, %v805
    %v807 = vrot.slane %v806, 1
    %v808 = vmin.f32 %v806, %v807
    %v809 = vmax.f32 %v808, 0.0
    %810 = vst [vmem:[#allocation9 + $0x7] sm:$0x1] %v809
    %s811 = sld [smem:[#allocation2 + $0xd]]
    %s812 = sld [smem:[#allocation2 + $0xe]]
    %s813 = sld [smem:[#allocation2 + $0xf]]
    %s814 = sld [smem:[#allocation2 + $0x10]]
    %s815 = sld [smem:[#allocation2 + $0x11]]
    %v816 = vld [vmem:[%s519] sm:$0xff]
    %v817 = vld [vmem:[%s519 + $0x8] sm:$0xff]
    %v818 = vld [vmem:[%s519 + $0x10] sm:$0xff]
    %v819 = vld [vmem:[%s519 + $0x18] sm:$0xf]
    %v820 = vmul.f32 %v816, %v816
    %v821 = vmul.f32 %v817, %v817
    %v822 = vmul.f32 %v818, %v818
    %v823 = vmul.f32 %v819, %v819
    %v824 = vstv %s811
    %v825 = vmul.f32 %v824, %v816
    %v826 = vmul.f32 %v824, %v817
    %v827 = vmul.f32 %v824, %v818
    %v828 = vmul.f32 %v824, %v819
    %v829 = vld [vmem:[%s519 + $0x1] sm:$0xff]
    %v830 = vld [vmem:[%s519 + $0x9] sm:$0xff]
    %v831 = vld [vmem:[%s519 + $0x11] sm:$0xff]
    %v832 = vld [vmem:[%s519 + $0x19] sm:$0xf]
    %v833 = vmul.f32 %v829, %v829
    %v834 = vmul.f32 %v830, %v830
    %v835 = vmul.f32 %v831, %v831
    %v836 = vmul.f32 %v832, %v832
    %v837 = vadd.f32 %v820, %v833
    %v838 = vadd.f32 %v821, %v834
    %v839 = vadd.f32 %v822, %v835
    %v840 = vadd.f32 %v823, %v836
    %v841 = vstv %s812
    %v842 = vmul.f32 %v841, %v829
    %v843 = vmul.f32 %v841, %v830
    %v844 = vmul.f32 %v841, %v831
    %v845 = vmul.f32 %v841, %v832
    %v846 = vadd.f32 %v825, %v842
    %v847 = vadd.f32 %v826, %v843
    %v848 = vadd.f32 %v827, %v844
    %v849 = vadd.f32 %v828, %v845
    %v850 = vld [vmem:[%s519 + $0x2] sm:$0xff]
    %v851 = vld [vmem:[%s519 + $0xa] sm:$0xff]
    %v852 = vld [vmem:[%s519 + $0x12] sm:$0xff]
    %v853 = vld [vmem:[%s519 + $0x1a] sm:$0xf]
    %v854 = vmul.f32 %v850, %v850
    %v855 = vmul.f32 %v851, %v851
    %v856 = vmul.f32 %v852, %v852
    %v857 = vmul.f32 %v853, %v853
    %v858 = vadd.f32 %v837, %v854
    %v859 = vadd.f32 %v838, %v855
    %v860 = vadd.f32 %v839, %v856
    %v861 = vadd.f32 %v840, %v857
    %v862 = vstv %s813
    %v863 = vmul.f32 %v862, %v850
    %v864 = vmul.f32 %v862, %v851
    %v865 = vmul.f32 %v862, %v852
    %v866 = vmul.f32 %v862, %v853
    %v867 = vadd.f32 %v846, %v863
    %v868 = vadd.f32 %v847, %v864
    %v869 = vadd.f32 %v848, %v865
    %v870 = vadd.f32 %v849, %v866
    %v871 = vld [vmem:[%s519 + $0x3] sm:$0xff]
    %v872 = vld [vmem:[%s519 + $0xb] sm:$0xff]
    %v873 = vld [vmem:[%s519 + $0x13] sm:$0xff]
    %v874 = vld [vmem:[%s519 + $0x1b] sm:$0xf]
    %v875 = vmul.f32 %v871, %v871
    %v876 = vmul.f32 %v872, %v872
    %v877 = vmul.f32 %v873, %v873
    %v878 = vmul.f32 %v874, %v874
    %v879 = vadd.f32 %v858, %v875
    %v880 = vadd.f32 %v859, %v876
    %v881 = vadd.f32 %v860, %v877
    %v882 = vadd.f32 %v861, %v878
    %v883 = vstv %s814
    %v884 = vmul.f32 %v883, %v871
    %v885 = vmul.f32 %v883, %v872
    %v886 = vmul.f32 %v883, %v873
    %v887 = vmul.f32 %v883, %v874
    %v888 = vadd.f32 %v867, %v884
    %v889 = vadd.f32 %v868, %v885
    %v890 = vadd.f32 %v869, %v886
    %v891 = vadd.f32 %v870, %v887
    %v892 = vld [vmem:[%s519 + $0x4] sm:$0xff]
    %v893 = vld [vmem:[%s519 + $0xc] sm:$0xff]
    %v894 = vld [vmem:[%s519 + $0x14] sm:$0xff]
    %v895 = vld [vmem:[%s519 + $0x1c] sm:$0xf]
    %v896 = vmul.f32 %v892, %v892
    %v897 = vmul.f32 %v893, %v893
    %v898 = vmul.f32 %v894, %v894
    %v899 = vmul.f32 %v895, %v895
    %v900 = vadd.f32 %v879, %v896
    %v901 = vadd.f32 %v880, %v897
    %v902 = vadd.f32 %v881, %v898
    %v903 = vadd.f32 %v882, %v899
    %v904 = vstv %s815
    %v905 = vmul.f32 %v904, %v892
    %v906 = vmul.f32 %v904, %v893
    %v907 = vmul.f32 %v904, %v894
    %v908 = vmul.f32 %v904, %v895
    %v909 = vadd.f32 %v888, %v905
    %v910 = vadd.f32 %v889, %v906
    %v911 = vadd.f32 %v890, %v907
    %v912 = vadd.f32 %v891, %v908
    %s913 = sld [smem:[#allocation6 + $0x7]]
    %v914 = vmul.f32 %v909, 2.0
    %v915 = vmul.f32 %v910, 2.0
    %v916 = vmul.f32 %v911, 2.0
    %v917 = vmul.f32 %v912, 2.0
    %v918 = vstv %s913
    %v919 = vsub.f32 %v918, %v914
    %v920 = vsub.f32 %v918, %v915
    %v921 = vsub.f32 %v918, %v916
    %v922 = vsub.f32 %v918, %v917
    %v923 = vadd.f32 %v919, %v900
    %v924 = vadd.f32 %v920, %v901
    %v925 = vadd.f32 %v921, %v902
    %v926 = vadd.f32 %v922, %v903
    %v927 = vld [vmem:[%s3] sm:$0xff]
    %v928 = vld [vmem:[%s3 + $0x8] sm:$0xff]
    %v929 = vld [vmem:[%s3 + $0x10] sm:$0xff]
    %v930 = vld [vmem:[%s3 + $0x18] sm:$0xf]
    %932 = vset.pattern.permute.xlu0 3
    %933 = vperm.xlu0 %932, %v927
    %v934 = vpop.permute.xlu0 %933
    %937 = vset.pattern.permute.xlu0 3
    %938 = vperm.xlu0 %937, %v928
    %v939 = vpop.permute.xlu0 %938
    %942 = vset.pattern.permute.xlu0 3
    %943 = vperm.xlu0 %942, %v929
    %v944 = vpop.permute.xlu0 %943
    %947 = vset.pattern.permute.xlu0 3
    %948 = vperm.xlu0 %947, %v930
    %v949 = vpop.permute.xlu0 %948
    %v951 = vmul.f32 %v923, %v934
    %v952 = vmul.f32 %v924, %v939
    %v953 = vmul.f32 %v925, %v944
    %v954 = vmul.f32 %v926, %v949
    %v955 = vsel %vm279, %v954, inf
    %v956 = vmin.f32 %v951, %v952
    %v957 = vmin.f32 %v953, %v955
    %v958 = vmin.f32 %v956, %v957
    %v959 = vrot.slane %v958, 4
    %v960 = vmin.f32 %v958, %v959
    %v961 = vrot.slane %v960, 2
    %v962 = vmin.f32 %v960, %v961
    %v963 = vrot.slane %v962, 1
    %v964 = vmin.f32 %v962, %v963
    %v965 = vmax.f32 %v964, 0.0
    %966 = vst [vmem:[#allocation9 + $0x3] sm:$0x1] %v965
    %s967 = sld [smem:[#allocation2 + $0x12]]
    %s968 = sld [smem:[#allocation2 + $0x13]]
    %s969 = sld [smem:[#allocation2 + $0x14]]
    %s970 = sld [smem:[#allocation2 + $0x15]]
    %s971 = sld [smem:[#allocation2 + $0x16]]
    %s972 = scalar_lea.vmem [#allocation8], 96
    %v973 = vld [vmem:[%s972] sm:$0xff]
    %v974 = vld [vmem:[%s972 + $0x8] sm:$0xff]
    %v975 = vld [vmem:[%s972 + $0x10] sm:$0xff]
    %v976 = vmul.f32 %v973, %v973
    %v977 = vmul.f32 %v974, %v974
    %v978 = vmul.f32 %v975, %v975
    %v979 = vstv %s967
    %v980 = vmul.f32 %v979, %v973
    %v981 = vmul.f32 %v979, %v974
    %v982 = vmul.f32 %v979, %v975
    %v983 = vld [vmem:[%s972 + $0x2] sm:$0xff]
    %v984 = vld [vmem:[%s972 + $0xa] sm:$0xff]
    %v985 = vld [vmem:[%s972 + $0x12] sm:$0xff]
    %v986 = vmul.f32 %v983, %v983
    %v987 = vmul.f32 %v984, %v984
    %v988 = vmul.f32 %v985, %v985
    %v989 = vadd.f32 %v976, %v986
    %v990 = vadd.f32 %v977, %v987
    %v991 = vadd.f32 %v978, %v988
    %v992 = vadd.f32 %v973, %v983
    %v993 = vadd.f32 %v974, %v984
    %v994 = vadd.f32 %v975, %v985
    %v995 = vstv %s968
    %v996 = vmul.f32 %v995, %v983
    %v997 = vmul.f32 %v995, %v984
    %v998 = vmul.f32 %v995, %v985
    %v999 = vadd.f32 %v980, %v996
    %v1000 = vadd.f32 %v981, %v997
    %v1001 = vadd.f32 %v982, %v998
    %v1002 = vld [vmem:[%s972 + $0x4] sm:$0xff]
    %v1003 = vld [vmem:[%s972 + $0xc] sm:$0xff]
    %v1004 = vld [vmem:[%s972 + $0x14] sm:$0xff]
    %v1005 = vmul.f32 %v1002, %v1002
    %v1006 = vmul.f32 %v1003, %v1003
    %v1007 = vmul.f32 %v1004, %v1004
    %v1008 = vadd.f32 %v989, %v1005
    %v1009 = vadd.f32 %v990, %v1006
    %v1010 = vadd.f32 %v991, %v1007
    %v1011 = vadd.f32 %v992, %v1002
    %v1012 = vadd.f32 %v993, %v1003
    %v1013 = vadd.f32 %v994, %v1004
    %v1014 = vstv %s969
    %v1015 = vmul.f32 %v1014, %v1002
    %v1016 = vmul.f32 %v1014, %v1003
    %v1017 = vmul.f32 %v1014, %v1004
    %v1018 = vadd.f32 %v999, %v1015
    %v1019 = vadd.f32 %v1000, %v1016
    %v1020 = vadd.f32 %v1001, %v1017
    %v1021 = vld [vmem:[%s972 + $0x6] sm:$0xff]
    %v1022 = vld [vmem:[%s972 + $0xe] sm:$0xff]
    %v1023 = vld [vmem:[%s972 + $0x16] sm:$0xff]
    %v1024 = vmul.f32 %v1021, %v1021
    %v1025 = vmul.f32 %v1022, %v1022
    %v1026 = vmul.f32 %v1023, %v1023
    %v1027 = vadd.f32 %v1008, %v1024
    %v1028 = vadd.f32 %v1009, %v1025
    %v1029 = vadd.f32 %v1010, %v1026
    %v1030 = vadd.f32 %v1011, %v1021
    %v1031 = vadd.f32 %v1012, %v1022
    %v1032 = vadd.f32 %v1013, %v1023
    %v1033 = vstv %s970
    %v1034 = vmul.f32 %v1033, %v1021
    %v1035 = vmul.f32 %v1033, %v1022
    %v1036 = vmul.f32 %v1033, %v1023
    %v1037 = vadd.f32 %v1018, %v1034
    %v1038 = vadd.f32 %v1019, %v1035
    %v1039 = vadd.f32 %v1020, %v1036
    %v1040 = vld [vmem:[%s972 + $0x18] sm:$0xff]
    %v1041 = vmul.f32 %v1040, %v1040
    %v1042 = vadd.f32 %v1027, %v977
    %v1043 = vadd.f32 %v1028, %v978
    %v1044 = vadd.f32 %v1029, %v1041
    %v1045 = vadd.f32 %v1030, %v974
    %v1046 = vadd.f32 %v1031, %v975
    %v1047 = vadd.f32 %v1032, %v1040
    %v1048 = vstv %s971
    %v1049 = vmul.f32 %v1048, %v974
    %v1050 = vmul.f32 %v1048, %v975
    %v1051 = vmul.f32 %v1048, %v1040
    %v1052 = vadd.f32 %v1037, %v1049
    %v1053 = vadd.f32 %v1038, %v1050
    %v1054 = vadd.f32 %v1039, %v1051
    %v1055 = vmul.f32 %v1045, 0.2
    %v1056 = vmul.f32 %v1046, 0.2
    %v1057 = vmul.f32 %v1047, 0.2
    %v1058 = vmul.f32 %v1055, 5.0
    %v1059 = vmul.f32 %v1056, 5.0
    %v1060 = vmul.f32 %v1057, 5.0
    %v1061 = vmul.f32 %v1058, %v1055
    %v1062 = vmul.f32 %v1059, %v1056
    %v1063 = vmul.f32 %v1060, %v1057
    %v1064 = vsub.f32 %v1042, %v1061
    %v1065 = vsub.f32 %v1043, %v1062
    %v1066 = vsub.f32 %v1044, %v1063
    %s1067 = sld [smem:[#allocation6 + $0x8]]
    %s1068 = sld [smem:[#allocation6 + $0x9]]
    %v1069 = vmul.f32 %v1052, 2.0
    %v1070 = vmul.f32 %v1053, 2.0
    %v1071 = vmul.f32 %v1054, 2.0
    %v1072 = vstv %s1068
    %v1073 = vsub.f32 %v1072, %v1069
    %v1074 = vsub.f32 %v1072, %v1070
    %v1075 = vsub.f32 %v1072, %v1071
    %v1076 = vmul.f32 %v1055, 2.0
    %v1077 = vmul.f32 %v1056, 2.0
    %v1078 = vmul.f32 %v1057, 2.0
    %v1079 = vstv %s1067
    %v1080 = vmul.f32 %v1076, %v1079
    %v1081 = vmul.f32 %v1077, %v1079
    %v1082 = vmul.f32 %v1078, %v1079
    %v1083 = vadd.f32 %v1073, %v1080
    %v1084 = vadd.f32 %v1074, %v1081
    %v1085 = vadd.f32 %v1075, %v1082
    %v1086 = vadd.f32 %v1083, %v1064
    %v1087 = vadd.f32 %v1084, %v1065
    %v1088 = vadd.f32 %v1085, %v1066
    %v1089 = vld [vmem:[%s3] sm:$0xff]
    %v1090 = vld [vmem:[%s3 + $0x8] sm:$0xff]
    %v1091 = vld [vmem:[%s3 + $0x10] sm:$0xff]
    %1093 = vset.pattern.permute.xlu0 4
    %1094 = vperm.xlu0 %1093, %v1089
    %v1095 = vpop.permute.xlu0 %1094
    %1098 = vset.pattern.permute.xlu0 4
    %1099 = vperm.xlu0 %1098, %v1090
    %v1100 = vpop.permute.xlu0 %1099
    %1103 = vset.pattern.permute.xlu0 4
    %1104 = vperm.xlu0 %1103, %v1091
    %v1105 = vpop.permute.xlu0 %1104
    %v1107 = vmul.f32 %v1086, %v1095
    %v1108 = vmul.f32 %v1087, %v1100
    %v1109 = vmul.f32 %v1088, %v1105
    %v1110 = vmin.f32 %v1107, %v1108
    %v1111 = vmin.f32 %v1110, %v1109
    %v1112 = vrot.slane %v1111, 4
    %v1113 = vmin.f32 %v1111, %v1112
    %v1114 = vrot.slane %v1113, 2
    %v1115 = vmin.f32 %v1113, %v1114
    %v1116 = vrot.slane %v1115, 1
    %v1117 = vmin.f32 %v1115, %v1116
    %v1118 = vmax.f32 %v1117, 0.0
    %1119 = vst [vmem:[#allocation9 + $0x4] sm:$0x1] %v1118
    %s1120 = sld [smem:[#allocation2 + $0x17]]
    %s1121 = sld [smem:[#allocation2 + $0x18]]
    %s1122 = sld [smem:[#allocation2 + $0x19]]
    %v1123 = vld [vmem:[#allocation8] sm:$0xff]
    %v1124 = vld [vmem:[#allocation8 + $0x8] sm:$0xff]
    %v1125 = vld [vmem:[#allocation8 + $0x10] sm:$0xff]
    %v1126 = vld [vmem:[#allocation8 + $0x18] sm:$0x3]
    %v1127 = vmul.f32 %v1123, %v1123
    %v1128 = vmul.f32 %v1124, %v1124
    %v1129 = vmul.f32 %v1125, %v1125
    %v1130 = vmul.f32 %v1126, %v1126
    %v1131 = vstv %s1120
    %v1132 = vmul.f32 %v1131, %v1123
    %v1133 = vmul.f32 %v1131, %v1124
    %v1134 = vmul.f32 %v1131, %v1125
    %v1135 = vmul.f32 %v1131, %v1126
    %v1136 = vld [vmem:[#allocation8 + $0x3] sm:$0xff]
    %v1137 = vld [vmem:[#allocation8 + $0xb] sm:$0xff]
    %v1138 = vld [vmem:[#allocation8 + $0x13] sm:$0xff]
    %v1139 = vld [vmem:[#allocation8 + $0x1b] sm:$0x3]
    %v1140 = vmul.f32 %v1136, %v1136
    %v1141 = vmul.f32 %v1137, %v1137
    %v1142 = vmul.f32 %v1138, %v1138
    %v1143 = vmul.f32 %v1139, %v1139
    %v1144 = vadd.f32 %v1127, %v1140
    %v1145 = vadd.f32 %v1128, %v1141
    %v1146 = vadd.f32 %v1129, %v1142
    %v1147 = vadd.f32 %v1130, %v1143
    %v1148 = vadd.f32 %v1123, %v1136
    %v1149 = vadd.f32 %v1124, %v1137
    %v1150 = vadd.f32 %v1125, %v1138
    %v1151 = vadd.f32 %v1126, %v1139
    %v1152 = vstv %s1121
    %v1153 = vmul.f32 %v1152, %v1136
    %v1154 = vmul.f32 %v1152, %v1137
    %v1155 = vmul.f32 %v1152, %v1138
    %v1156 = vmul.f32 %v1152, %v1139
    %v1157 = vadd.f32 %v1132, %v1153
    %v1158 = vadd.f32 %v1133, %v1154
    %v1159 = vadd.f32 %v1134, %v1155
    %v1160 = vadd.f32 %v1135, %v1156
    %v1161 = vld [vmem:[#allocation8 + $0x6] sm:$0xff]
    %v1162 = vld [vmem:[#allocation8 + $0xe] sm:$0xff]
    %v1163 = vld [vmem:[#allocation8 + $0x16] sm:$0xff]
    %v1164 = vld [vmem:[#allocation8 + $0x1e] sm:$0x3]
    %v1165 = vmul.f32 %v1161, %v1161
    %v1166 = vmul.f32 %v1162, %v1162
    %v1167 = vmul.f32 %v1163, %v1163
    %v1168 = vmul.f32 %v1164, %v1164
    %v1169 = vadd.f32 %v1144, %v1165
    %v1170 = vadd.f32 %v1145, %v1166
    %v1171 = vadd.f32 %v1146, %v1167
    %v1172 = vadd.f32 %v1147, %v1168
    %v1173 = vadd.f32 %v1148, %v1161
    %v1174 = vadd.f32 %v1149, %v1162
    %v1175 = vadd.f32 %v1150, %v1163
    %v1176 = vadd.f32 %v1151, %v1164
    %v1177 = vstv %s1122
    %v1178 = vmul.f32 %v1177, %v1161
    %v1179 = vmul.f32 %v1177, %v1162
    %v1180 = vmul.f32 %v1177, %v1163
    %v1181 = vmul.f32 %v1177, %v1164
    %v1182 = vadd.f32 %v1157, %v1178
    %v1183 = vadd.f32 %v1158, %v1179
    %v1184 = vadd.f32 %v1159, %v1180
    %v1185 = vadd.f32 %v1160, %v1181
    %v1186 = vmul.f32 %v1173, 0.33333334
    %v1187 = vmul.f32 %v1174, 0.33333334
    %v1188 = vmul.f32 %v1175, 0.33333334
    %v1189 = vmul.f32 %v1176, 0.33333334
    %v1190 = vmul.f32 %v1186, 3.0
    %v1191 = vmul.f32 %v1187, 3.0
    %v1192 = vmul.f32 %v1188, 3.0
    %v1193 = vmul.f32 %v1189, 3.0
    %v1194 = vmul.f32 %v1190, %v1186
    %v1195 = vmul.f32 %v1191, %v1187
    %v1196 = vmul.f32 %v1192, %v1188
    %v1197 = vmul.f32 %v1193, %v1189
    %v1198 = vsub.f32 %v1169, %v1194
    %v1199 = vsub.f32 %v1170, %v1195
    %v1200 = vsub.f32 %v1171, %v1196
    %v1201 = vsub.f32 %v1172, %v1197
    %v1202 = vmul.f32 %v1198, 0.5
    %v1203 = vmul.f32 %v1199, 0.5
    %v1204 = vmul.f32 %v1200, 0.5
    %v1205 = vmul.f32 %v1201, 0.5
    %v1206 = vmax.f32 %v1202, 0.0
    %v1207 = vmax.f32 %v1203, 0.0
    %v1208 = vmax.f32 %v1204, 0.0
    %v1209 = vmax.f32 %v1205, 0.0
    %v1210 = vrsqrt.pop %v1206
    %v1211 = vmul.f32 %v1206, %v1210
    %vm1212 = vcmp.eq.f32.partialorder %v1206, inf
    %v1213 = vsel %vm1212, %v1206, %v1211
    %vm1214 = vcmp.eq.f32.partialorder %v1206, 0.0
    %v1215 = vand.u32 %v1206, 2147483648
    %v1216 = vsel %vm1214, %v1215, %v1213
    %v1217 = vrsqrt.pop %v1207
    %v1218 = vmul.f32 %v1207, %v1217
    %vm1219 = vcmp.eq.f32.partialorder %v1207, inf
    %v1220 = vsel %vm1219, %v1207, %v1218
    %vm1221 = vcmp.eq.f32.partialorder %v1207, 0.0
    %v1222 = vand.u32 %v1207, 2147483648
    %v1223 = vsel %vm1221, %v1222, %v1220
    %v1224 = vrsqrt.pop %v1208
    %v1225 = vmul.f32 %v1208, %v1224
    %vm1226 = vcmp.eq.f32.partialorder %v1208, inf
    %v1227 = vsel %vm1226, %v1208, %v1225
    %vm1228 = vcmp.eq.f32.partialorder %v1208, 0.0
    %v1229 = vand.u32 %v1208, 2147483648
    %v1230 = vsel %vm1228, %v1229, %v1227
    %v1231 = vrsqrt.pop %v1209
    %v1232 = vmul.f32 %v1209, %v1231
    %vm1233 = vcmp.eq.f32.partialorder %v1209, inf
    %v1234 = vsel %vm1233, %v1209, %v1232
    %vm1235 = vcmp.eq.f32.partialorder %v1209, 0.0
    %v1236 = vand.u32 %v1209, 2147483648
    %v1237 = vsel %vm1235, %v1236, %v1234
    %s1238 = sld [smem:[#allocation6 + $0xa]]
    %s1239 = sld [smem:[#allocation6 + $0xb]]
    %v1240 = vadd.f32 %v1216, 1e-05
    %v1241 = vadd.f32 %v1223, 1e-05
    %v1242 = vadd.f32 %v1230, 1e-05
    %v1243 = vadd.f32 %v1237, 1e-05
    %v1244 = vrcp.pop %v1240
    %v1245 = vmul.f32 1.0, %v1244
    %v1246 = vrcp.pop %v1241
    %v1247 = vmul.f32 1.0, %v1246
    %v1248 = vrcp.pop %v1242
    %v1249 = vmul.f32 1.0, %v1248
    %v1250 = vrcp.pop %v1243
    %v1251 = vmul.f32 1.0, %v1250
    %v1252 = vmul.f32 %v1245, 2.0
    %v1253 = vmul.f32 %v1247, 2.0
    %v1254 = vmul.f32 %v1249, 2.0
    %v1255 = vmul.f32 %v1251, 2.0
    %v1256 = vstv %s1238
    %v1257 = vmul.f32 %v1186, %v1256
    %v1258 = vmul.f32 %v1187, %v1256
    %v1259 = vmul.f32 %v1188, %v1256
    %v1260 = vmul.f32 %v1189, %v1256
    %v1261 = vsub.f32 %v1182, %v1257
    %v1262 = vsub.f32 %v1183, %v1258
    %v1263 = vsub.f32 %v1184, %v1259
    %v1264 = vsub.f32 %v1185, %v1260
    %v1265 = vmul.f32 %v1252, %v1261
    %v1266 = vmul.f32 %v1253, %v1262
    %v1267 = vmul.f32 %v1254, %v1263
    %v1268 = vmul.f32 %v1255, %v1264
    %v1269 = vstv %s1239
    %v1270 = vsub.f32 %v1269, %v1265
    %v1271 = vsub.f32 %v1269, %v1266
    %v1272 = vsub.f32 %v1269, %v1267
    %v1273 = vsub.f32 %v1269, %v1268
    %v1274 = vmul.f32 %v1245, %v1245
    %v1275 = vmul.f32 %v1247, %v1247
    %v1276 = vmul.f32 %v1249, %v1249
    %v1277 = vmul.f32 %v1251, %v1251
    %v1278 = vmul.f32 %v1274, %v1198
    %v1279 = vmul.f32 %v1275, %v1199
    %v1280 = vmul.f32 %v1276, %v1200
    %v1281 = vmul.f32 %v1277, %v1201
    %v1282 = vadd.f32 %v1270, %v1278
    %v1283 = vadd.f32 %v1271, %v1279
    %v1284 = vadd.f32 %v1272, %v1280
    %v1285 = vadd.f32 %v1273, %v1281
    %v1286 = vld [vmem:[%s3] sm:$0xff]
    %v1287 = vld [vmem:[%s3 + $0x8] sm:$0xff]
    %v1288 = vld [vmem:[%s3 + $0x10] sm:$0xff]
    %v1289 = vld [vmem:[%s3 + $0x18] sm:$0x3]
    %1291 = vset.pattern.permute.xlu0 5
    %1292 = vperm.xlu0 %1291, %v1286
    %v1293 = vpop.permute.xlu0 %1292
    %1296 = vset.pattern.permute.xlu0 5
    %1297 = vperm.xlu0 %1296, %v1287
    %v1298 = vpop.permute.xlu0 %1297
    %1301 = vset.pattern.permute.xlu0 5
    %1302 = vperm.xlu0 %1301, %v1288
    %v1303 = vpop.permute.xlu0 %1302
    %1306 = vset.pattern.permute.xlu0 5
    %1307 = vperm.xlu0 %1306, %v1289
    %v1308 = vpop.permute.xlu0 %1307
    %v1310 = vmul.f32 %v1282, %v1293
    %v1311 = vmul.f32 %v1283, %v1298
    %v1312 = vmul.f32 %v1284, %v1303
    %v1313 = vmul.f32 %v1285, %v1308
    %v1314 = vsel %vm734, %v1313, inf
    %v1315 = vmin.f32 %v1310, %v1311
    %v1316 = vmin.f32 %v1312, %v1314
    %v1317 = vmin.f32 %v1315, %v1316
    %v1318 = vrot.slane %v1317, 4
    %v1319 = vmin.f32 %v1317, %v1318
    %v1320 = vrot.slane %v1319, 2
    %v1321 = vmin.f32 %v1319, %v1320
    %v1322 = vrot.slane %v1321, 1
    %v1323 = vmin.f32 %v1321, %v1322
    %v1324 = vmax.f32 %v1323, 0.0
    %1325 = vst [vmem:[#allocation9 + $0x5] sm:$0x1] %v1324
    // Predicated region
    $region30: #{tpu_custom_call.1} parent=1 // pred_check
      _
    $region31: #{tpu_custom_call.1} parent=1 // pred_check_branch
      %1327 = sbr.rel (0) target = $region33
    $region32: #{tpu_custom_call.1} parent=1 // pred_region
      %s1329 = ssub.s32 128, 128
      %1330 = vsyncadd [#allocation4], %s1329
      %s1332 = sshll.u32 [#allocation9], 4
      %s1333 = int_to_ptr.vmem [resolvable:$true] %s1332
      %1335 = dma.vmem_to_hbm [thread:$0]  %s1333, 128, %s4, [#allocation4]
    $region33: #{tpu_custom_call.1} parent=1 // pred_fallthru
      _
    // Predicated region
    $region34: #{tpu_custom_call.1} parent=1 // pred_check
      _
    $region35: #{tpu_custom_call.1} parent=1 // pred_check_branch
      %1337 = sbr.rel (0) target = $region37
    $region36: #{tpu_custom_call.1} parent=1 // pred_region
      %1338 = dma.done [#allocation4], 128
    $region37: #{tpu_custom_call.1} parent=1 // pred_fallthru
      _
    %1339 = vsyncpa [#allocation3], 1
    %1340 = vsyncpa [#allocation4], 1
    %1341 = vsyncpa [#allocation5], 1
    %1342 = vsyncpa [#allocation7], 1

</llo_original>
